<compile_context>
chip_gen: v7x
topology: tpu7x:2x2x1
jax: 0.10.0
libtpu: 0.0.40
codegen_flags: <defaults>
</compile_context>

<pallas_src>
import functools

import jax
import jax.numpy as jnp
from jax.experimental import pallas as pl
from jax.experimental.pallas import tpu as pltpu

_LANES = 128
_SENTINEL = 1e30  # norm term for padded codebook rows -> they can never be the argmin


def _round_up(x, m):
    return ((x + m - 1) // m) * m


def _vmem_budget_bytes():
    """Generation-aware VMEM budget: ~96 MiB on v5e/v6e (128 MiB physical), ~48 MiB on
    v7x (64 MiB physical); conservative 48 MiB if the query is unavailable."""
    phys = None
    try:
        phys = getattr(pltpu.get_tpu_info(), "vmem_capacity_bytes", None)
    except Exception:
        phys = None
    if not phys:
        phys = 64 * 1024 * 1024
    return int(min(phys - 16 * 1024 * 1024, phys * 3 // 4))


def _pick_tile_n(HW, D, Kp, k_chunk, x_itemsize, op_itemsize, tile_n, budget_bytes):
    """Largest lane-aligned column tile whose per-step VMEM footprint fits the budget."""
    if HW <= _LANES:
        return HW                                      # full extent (block == array dim)
    cap = max(_LANES, (HW // _LANES) * _LANES)
    tn = max(_LANES, (min(tile_n, cap) // _LANES) * _LANES)
    while tn > _LANES:
        footprint = (
            2 * D * tn * x_itemsize                    # x tile, double-buffered by the pipeline
            + 2 * Kp * (D + 1) * op_itemsize           # codebook (worst case: double-buffered)
            + 2 * tn * 4                               # (1, tn) int32 index row, double-buffered
            + 2 * (D + 1) * tn * op_itemsize           # x_aug scratch + its vreg copy
            + 3 * k_chunk * tn * 4                     # per-chunk dist / index / running-min temps
        )
        if footprint <= budget_bytes:
            break
        tn = max(_LANES, ((tn // 2) // _LANES) * _LANES)
    return tn


def _vq_indices_kernel(x_ref, cb_ref, idx_ref, xaug_ref, *, k_chunk, op_dtype):
    """One grid step: full (padded, augmented) codebook vs one (D, TN) column tile.

    cb_ref : (Kp, D+1) = [-c_k | 0.5*||c_k||^2]  (padded rows: zeros | +1e30)
    x_ref  : (D, TN) input columns (native NCHW layout; lanes = spatial positions)
    dist[k, n] = 0.5*||c_k||^2 - c_k . x_n   (same argmin as the full squared distance;
                                              ||x_n||^2 is constant per column)
    idx_ref: (1, TN) int32, argmin_k dist  (first occurrence on ties, like torch.min)
    """
    d, tn = x_ref.shape
    kp = cb_ref.shape[0]
    num_kc = kp // k_chunk

    x = x_ref[...]
    if x.dtype != op_dtype:
        x = x.astype(op_dtype)                 # in-kernel cast: no extra HBM pass
    # Assemble [x; 1] in scratch (avoids an unaligned sublane concatenate).
    xaug_ref[:d, :] = x
    xaug_ref[d:, :] = jnp.ones((1, tn), dtype=op_dtype)
    x_aug = xaug_ref[...]                      # (D+1, TN)

    def body(c, carry):
        min_v, min_i = carry
        start = pl.multiple_of(c * k_chunk, k_chunk)
        dist = jnp.dot(cb_ref[pl.ds(start, k_chunk), :], x_aug,
                       preferred_element_type=jnp.float32)          # (KC, TN), f32 acc on MXU
        cmin = jnp.min(dist, axis=0, keepdims=True)                 # (1, TN)
        rows = jax.lax.broadcasted_iota(jnp.int32, (k_chunk, 1), 0) + c * k_chunk
        cidx = jnp.min(jnp.where(dist == cmin, rows, kp),
                       axis=0, keepdims=True).astype(jnp.int32)     # first occurrence in chunk
        better = cmin < min_v                                       # strict: keep earlier on ties
        return jnp.where(better, cmin, min_v), jnp.where(better, cidx, min_i)

    init = (jnp.full((1, tn), jnp.inf, dtype=jnp.float32),
            jnp.zeros((1, tn), dtype=jnp.int32))
    _, min_idx = jax.lax.fori_loop(0, num_kc, body, init,
                                   unroll=True if num_kc <= 8 else False)
    idx_ref[...] = min_idx                                          # lane-dense (1, TN) store


def _build_vq_call(kernel, B, HW, D, Kp, tn, op_dtype, budget_bytes,
                   flops, bytes_accessed, single_buffer_codebook):
    cb_kwargs = {}
    if single_buffer_codebook:
        # Grid-invariant block: one VMEM buffer suffices; double-buffering it buys no
        # pipelining and just wastes VMEM (matters most on v7x's 64 MiB).
        cb_kwargs["pipeline_mode"] = pl.Buffered(1)
    return pl.pallas_call(
        kernel,
        out_shape=jax.ShapeDtypeStruct((B, 1, HW), jnp.int32),
        grid_spec=pltpu.PrefetchScalarGridSpec(
            num_scalar_prefetch=0,
            grid=(B, pl.cdiv(HW, tn)),
            in_specs=[
                # x: (B, D, HW) -> (D, tn) tile, batch dim squeezed out of the kernel Ref.
                pl.BlockSpec((None, D, tn), lambda b, i: (b, 0, i)),
                # augmented codebook: one full block, grid-invariant.
                pl.BlockSpec((Kp, D + 1), lambda b, i: (0, 0), **cb_kwargs),
            ],
            out_specs=pl.BlockSpec((None, 1, tn), lambda b, i: (b, 0, i)),
            scratch_shapes=[pltpu.VMEM((D + 1, tn), op_dtype)],      # [x; 1] staging
        ),
        compiler_params=pltpu.CompilerParams(
            dimension_semantics=("parallel", "parallel"),
            vmem_limit_bytes=int(budget_bytes),
        ),
        cost_estimate=pl.CostEstimate(flops=flops, transcendentals=0,
                                      bytes_accessed=bytes_accessed),
    )


def vq_embedding_forward(z_e_x, codebook, *, tile_n=2048, matmul_dtype=jnp.bfloat16):
    """Equivalent of VQEmbedding.forward: nearest-codeword indices of shape (B, H, W).

    matmul_dtype: dtype of the MXU operands.  Default bf16 (codebook pre-cast once in
    the wrapper; the x tile is cast inside the kernel, so no extra HBM pass).  Pass
    None for a full-precision (input-dtype) distance computation.
    """
    B, D, H, W = z_e_x.shape
    K, D2 = codebook.shape
    assert D == D2, "channel dim of z_e_x must equal embedding dim D"
    HW = H * W

    op_dtype = jnp.dtype(matmul_dtype) if matmul_dtype is not None else jnp.dtype(z_e_x.dtype)

    # NCHW -> (B, D, H*W) is a FREE reshape (no transpose, no extra HBM pass).  Column
    # n of batch b is spatial position (h, w) with n = h*W + w, i.e. exactly the row
    # order of the module's NHWC flatten, so the indices reshape straight to (B, H, W).
    x3 = z_e_x.reshape(B, D, HW)

    # Pad K to the MXU-friendly multiple: 256 (v6e/v7x 256x256 MXU) when K > 128.
    if K <= _LANES:
        Kp = _round_up(K, _LANES)
        k_chunk = Kp
    else:
        Kp = _round_up(K, 2 * _LANES)
        k_chunk = 2 * _LANES

    # Augmented codebook [-c_k | 0.5*||c_k||^2] (one-time, tiny).  Half-norms are
    # computed from the *cast* codebook so the bf16 path is self-consistent.
    cb = codebook.astype(op_dtype)
    half_sqr = 0.5 * jnp.sum(cb.astype(jnp.float32) ** 2, axis=1)                 # (K,) f32
    cb_aug = jnp.concatenate([-cb, half_sqr[:, None].astype(op_dtype)], axis=1)   # (K, D+1)
    if Kp != K:
        pad = jnp.zeros((Kp - K, D + 1), op_dtype).at[:, D].set(
            jnp.asarray(_SENTINEL, dtype=op_dtype))
        cb_aug = jnp.concatenate([cb_aug, pad], axis=0)                           # (Kp, D+1)

    budget = _vmem_budget_bytes()
    x_itemsize = jnp.dtype(z_e_x.dtype).itemsize
    op_itemsize = jnp.dtype(op_dtype).itemsize
    tn = _pick_tile_n(HW, D, Kp, k_chunk, x_itemsize, op_itemsize, tile_n, budget)

    kernel = functools.partial(_vq_indices_kernel, k_chunk=k_chunk, op_dtype=op_dtype)
    flops = 2 * B * HW * (D + 1) * Kp
    bytes_accessed = int(B * HW * D * x_itemsize + Kp * (D + 1) * op_itemsize + B * HW * 4)

    single_buffer = hasattr(pl, "Buffered")
    try:
        idx = _build_vq_call(kernel, B, HW, D, Kp, tn, op_dtype, budget,
                             flops, bytes_accessed, single_buffer)(x3, cb_aug)
    except Exception:
        if not single_buffer:
            raise
        # pipeline_mode=pl.Buffered(1) rejected on this jax/libtpu combo: fall back to
        # the default double-buffered constant block (correctness unaffected).
        idx = _build_vq_call(kernel, B, HW, D, Kp, tn, op_dtype, budget,
                             flops, bytes_accessed, False)(x3, cb_aug)

    return idx.reshape(B, H, W)


def make_vq_embedding_params(key, K, D):
    """nn.Embedding(K, D) with weight.uniform_(-1/K, 1/K), deterministic."""
    return jax.random.uniform(key, (K, D), dtype=jnp.float32,
                              minval=-1.0 / K, maxval=1.0 / K)


# TODO(synk): straight_through() (codebook gather + straight-through-estimator backward)
# is not part of forward(); the gather is a plain jnp.take(codebook, indices, axis=0).


def _reference_distances(z_e_x, codebook):
    """Pure-JAX full squared distances mirroring the PyTorch math (f32, highest precision)."""
    B, D, H, W = z_e_x.shape
    x = jnp.transpose(z_e_x, (0, 2, 3, 1)).reshape(-1, D).astype(jnp.float32)
    cb = codebook.astype(jnp.float32)
    cross = jax.lax.dot_general(x, cb, (((1,), (1,)), ((), ())),
                                precision=jax.lax.Precision.HIGHEST)
    return (jnp.sum(x ** 2, axis=1, keepdims=True)
            + jnp.sum(cb ** 2, axis=1)[None, :]
            - 2.0 * cross)


if __name__ == "__main__":
    key = jax.random.PRNGKey(0)
    k_cb, k_x = jax.random.split(key)

    B, D, H, W = 2, 4, 16, 16   # z_e_x is NCHW with C == embedding dim D
    K = 16                      # codebook size

    codebook = make_vq_embedding_params(k_cb, K, D)
    z_e_x = jax.random.normal(k_x, (B, D, H, W), dtype=jnp.float32)

    dist_ref = _reference_distances(z_e_x, codebook)
    rows = jnp.arange(dist_ref.shape[0])
    idx_best = jnp.argmin(dist_ref, axis=1).astype(jnp.int32)
    best_d = dist_ref[rows, idx_best]

    # Default path: bf16 MXU operands (codebook pre-cast; x cast in-kernel).  The chosen
    # codeword must be (near-)optimal under the full-precision reference distance.
    latents = jax.block_until_ready(vq_embedding_forward(z_e_x, codebook))
    assert latents.shape == (B, H, W)
    assert latents.dtype == jnp.int32
    idx_ker = latents.reshape(-1)
    assert bool(jnp.all((idx_ker >= 0) & (idx_ker < K)))
    assert bool(jnp.all(dist_ref[rows, idx_ker] <= best_d + 5e-2))

    # Full-precision path: must match the reference argmin (up to exact FP near-ties).
    latents_f32 = jax.block_until_ready(
        vq_embedding_forward(z_e_x, codebook, matmul_dtype=None))
    idx_f32 = latents_f32.reshape(-1)
    assert bool(jnp.all((idx_f32 >= 0) & (idx_f32 < K)))
    assert bool(jnp.all(dist_ref[rows, idx_f32] <= best_d + 1e-4))
    assert float(jnp.mean((idx_f32 == idx_best).astype(jnp.float32))) > 0.95

    print("KERNEL_OK")
</pallas_src>

<mosaic_0001>
module attributes {stable_mosaic.version = 11 : i64} {
  func.func @_vq_indices_kernel(%arg0: i32, %arg1: i32, %arg2: memref<1x4x256xf32, #tpu.memory_space<vmem>>, %arg3: memref<128x5xbf16, #tpu.memory_space<vmem>>, %arg4: memref<1x1x256xi32, #tpu.memory_space<vmem>>, %arg5: memref<5x256xbf16, #tpu.memory_space<vmem>>) attributes {dimension_semantics = [#tpu.dimension_semantics<parallel>, #tpu.dimension_semantics<parallel>], iteration_bounds = array<i64: 2, 1>, scalar_prefetch = 0 : i64, scratch_operands = 1 : i64, tpu.core_type = #tpu.core_type<tc>, window_params = [{transform_indices = @transform_0, window_bounds = array<i64: 1, 4, 256>}, {pipeline_mode = #tpu.pipeline_mode<synchronous>, transform_indices = @transform_1, window_bounds = array<i64: 128, 5>}, {transform_indices = @transform_2, window_bounds = array<i64: 1, 1, 256>}]} {
    %c0 = arith.constant 0 : index
    %c0_0 = arith.constant 0 : index
    %c0_1 = arith.constant 0 : index
    %0 = vector.load %arg2[%c0, %c0_0, %c0_1] : memref<1x4x256xf32, #tpu.memory_space<vmem>>, vector<1x4x256xf32>
    %1 = vector.shape_cast %0 : vector<1x4x256xf32> to vector<4x256xf32>
    %2 = arith.truncf %1 : vector<4x256xf32> to vector<4x256xbf16>
    %c0_2 = arith.constant 0 : index
    %c0_3 = arith.constant 0 : index
    %3 = vector.load %arg5[%c0_2, %c0_3] : memref<5x256xbf16, #tpu.memory_space<vmem>>, vector<4x256xbf16>
    tpu.vector_store %arg5[%c0_2, %c0_3], %2 {strides = array<i32>} : memref<5x256xbf16, #tpu.memory_space<vmem>>, vector<4x256xbf16>,
    %cst = arith.constant 1.000000e+00 : bf16
    %4 = vector.broadcast %cst : bf16 to vector<1x256xbf16>
    %c4 = arith.constant 4 : index
    %c0_4 = arith.constant 0 : index
    %5 = vector.load %arg5[%c4, %c0_4] : memref<5x256xbf16, #tpu.memory_space<vmem>>, vector<1x256xbf16>
    tpu.vector_store %arg5[%c4, %c0_4], %4 {strides = array<i32>} : memref<5x256xbf16, #tpu.memory_space<vmem>>, vector<1x256xbf16>,
    %c0_5 = arith.constant 0 : index
    %c0_6 = arith.constant 0 : index
    %6 = vector.load %arg5[%c0_5, %c0_6] : memref<5x256xbf16, #tpu.memory_space<vmem>>, vector<5x256xbf16>
    %cst_7 = arith.constant 0x7F800000 : f32
    %7 = vector.broadcast %cst_7 : f32 to vector<1x256xf32>
    %c0_i32 = arith.constant 0 : i32
    %8 = vector.broadcast %c0_i32 : i32 to vector<1x256xi32>
    %c0_i32_8 = arith.constant 0 : i32
    %c128_i32 = arith.constant 128 : i32
    %9 = arith.muli %c0_i32_8, %c128_i32 : i32
    %10 = tpu.assume_multiple %9, 128 : i32
    %11 = arith.index_cast %10 : i32 to index
    %c0_9 = arith.constant 0 : index
    %12 = vector.load %arg3[%11, %c0_9] : memref<128x5xbf16, #tpu.memory_space<vmem>>, vector<128x5xbf16>
    %cst_10 = arith.constant dense<0.000000e+00> : vector<128x256xf32>
    %13 = tpu.matmul %12, %6, %cst_10 {dimension_numbers = #tpu.dot_dimension_numbers<[1], [0], [0], [1], [0, 0, 1, 1], [], []>} : vector<128x5xbf16>, vector<5x256xbf16>, vector<128x256xf32> -> vector<128x256xf32>
    %cst_11 = arith.constant dense<0x7F800000> : vector<256xf32>
    %14 = vector.multi_reduction <minimumf>, %13, %cst_11 [0] : vector<128x256xf32> to vector<256xf32>
    %15 = vector.shape_cast %14 : vector<256xf32> to vector<1x256xf32>
    %16 = tpu.iota {dimensions = array<i32: 0>} : vector<128x1xi32>
    %c128_i32_12 = arith.constant 128 : i32
    %17 = arith.muli %c0_i32_8, %c128_i32_12 : i32
    %18 = vector.broadcast %17 : i32 to vector<128x1xi32>
    %19 = arith.addi %16, %18 : vector<128x1xi32>
    %20 = vector.broadcast %15 : vector<1x256xf32> to vector<128x256xf32>
    %21 = arith.cmpf oeq, %13, %20 : vector<128x256xf32>
    %c128_i32_13 = arith.constant 128 : i32
    %22 = vector.shape_cast %19 : vector<128x1xi32> to vector<128x1xi32>
    %23 = vector.broadcast %22 : vector<128x1xi32> to vector<128x256xi32>
    %24 = vector.broadcast %c128_i32_13 : i32 to vector<128x256xi32>
    %25 = arith.select %21, %23, %24 : vector<128x256xi1>, vector<128x256xi32>
    %cst_14 = arith.constant dense<2147483647> : vector<256xi32>
    %26 = vector.multi_reduction <minsi>, %25, %cst_14 [0] : vector<128x256xi32> to vector<256xi32>
    %27 = vector.shape_cast %26 : vector<256xi32> to vector<1x256xi32>
    %28 = arith.cmpf olt, %15, %7 : vector<1x256xf32>
    %29 = arith.select %28, %15, %7 : vector<1x256xi1>, vector<1x256xf32>
    %30 = arith.select %28, %27, %8 : vector<1x256xi1>, vector<1x256xi32>
    %c1_i32 = arith.constant 1 : i32
    %c0_15 = arith.constant 0 : index
    %c0_16 = arith.constant 0 : index
    %c0_17 = arith.constant 0 : index
    %31 = vector.load %arg4[%c0_15, %c0_16, %c0_17] : memref<1x1x256xi32, #tpu.memory_space<vmem>>, vector<1x1x256xi32>
    %32 = vector.shape_cast %31 : vector<1x1x256xi32> to vector<1x256xi32>
    %33 = vector.shape_cast %30 : vector<1x256xi32> to vector<1x1x256xi32>
    tpu.vector_store %arg4[%c0_15, %c0_16, %c0_17], %33 {strides = array<i32>} : memref<1x1x256xi32, #tpu.memory_space<vmem>>, vector<1x1x256xi32>,
    return
  }
  func.func @transform_0(%arg0: i32, %arg1: i32) -> (i32, i32, i32) {
    %c0_i32 = arith.constant 0 : i32
    %c0_i32_0 = arith.constant 0 : i32
    return %arg0, %c0_i32, %arg1 : i32, i32, i32
  }
  func.func @transform_1(%arg0: i32, %arg1: i32) -> (i32, i32) {
    %c0_i32 = arith.constant 0 : i32
    %c0_i32_0 = arith.constant 0 : i32
    %c0_i32_1 = arith.constant 0 : i32
    return %c0_i32, %c0_i32_0 : i32, i32
  }
  func.func @transform_2(%arg0: i32, %arg1: i32) -> (i32, i32, i32) {
    %c0_i32 = arith.constant 0 : i32
    %c0_i32_0 = arith.constant 0 : i32
    return %arg0, %c0_i32, %arg1 : i32, i32, i32
  }
}

module attributes {stable_mosaic.version = 11 : i64} {
  func.func @_vq_indices_kernel(%arg0: i32, %arg1: i32, %arg2: memref<1x4x256xf32, #tpu.memory_space<vmem>>, %arg3: memref<128x5xbf16, #tpu.memory_space<vmem>>, %arg4: memref<1x1x256xi32, #tpu.memory_space<vmem>>, %arg5: memref<5x256xbf16, #tpu.memory_space<vmem>>) attributes {dimension_semantics = [#tpu.dimension_semantics<parallel>, #tpu.dimension_semantics<parallel>], iteration_bounds = array<i64: 2, 1>, scalar_prefetch = 0 : i64, scratch_operands = 1 : i64, tpu.core_type = #tpu.core_type<tc>, window_params = [{transform_indices = @transform_0, window_bounds = array<i64: 1, 4, 256>}, {pipeline_mode = #tpu.pipeline_mode<synchronous>, transform_indices = @transform_1, window_bounds = array<i64: 128, 5>}, {transform_indices = @transform_2, window_bounds = array<i64: 1, 1, 256>}]} {
    %c0 = arith.constant 0 : index
    %c0_0 = arith.constant 0 : index
    %c0_1 = arith.constant 0 : index
    %0 = vector.load %arg2[%c0, %c0_0, %c0_1] : memref<1x4x256xf32, #tpu.memory_space<vmem>>, vector<1x4x256xf32>
    %1 = vector.shape_cast %0 : vector<1x4x256xf32> to vector<4x256xf32>
    %2 = arith.truncf %1 : vector<4x256xf32> to vector<4x256xbf16>
    %c0_2 = arith.constant 0 : index
    %c0_3 = arith.constant 0 : index
    %3 = vector.load %arg5[%c0_2, %c0_3] : memref<5x256xbf16, #tpu.memory_space<vmem>>, vector<4x256xbf16>
    tpu.vector_store %arg5[%c0_2, %c0_3], %2 {strides = array<i32>} : memref<5x256xbf16, #tpu.memory_space<vmem>>, vector<4x256xbf16>,
    %cst = arith.constant 1.000000e+00 : bf16
    %4 = vector.broadcast %cst : bf16 to vector<1x256xbf16>
    %c4 = arith.constant 4 : index
    %c0_4 = arith.constant 0 : index
    %5 = vector.load %arg5[%c4, %c0_4] : memref<5x256xbf16, #tpu.memory_space<vmem>>, vector<1x256xbf16>
    tpu.vector_store %arg5[%c4, %c0_4], %4 {strides = array<i32>} : memref<5x256xbf16, #tpu.memory_space<vmem>>, vector<1x256xbf16>,
    %c0_5 = arith.constant 0 : index
    %c0_6 = arith.constant 0 : index
    %6 = vector.load %arg5[%c0_5, %c0_6] : memref<5x256xbf16, #tpu.memory_space<vmem>>, vector<5x256xbf16>
    %cst_7 = arith.constant 0x7F800000 : f32
    %7 = vector.broadcast %cst_7 : f32 to vector<1x256xf32>
    %c0_i32 = arith.constant 0 : i32
    %8 = vector.broadcast %c0_i32 : i32 to vector<1x256xi32>
    %c0_i32_8 = arith.constant 0 : i32
    %c128_i32 = arith.constant 128 : i32
    %9 = arith.muli %c0_i32_8, %c128_i32 : i32
    %10 = tpu.assume_multiple %9, 128 : i32
    %11 = arith.index_cast %10 : i32 to index
    %c0_9 = arith.constant 0 : index
    %12 = vector.load %arg3[%11, %c0_9] : memref<128x5xbf16, #tpu.memory_space<vmem>>, vector<128x5xbf16>
    %cst_10 = arith.constant dense<0.000000e+00> : vector<128x256xf32>
    %13 = tpu.matmul %12, %6, %cst_10 {dimension_numbers = #tpu.dot_dimension_numbers<[1], [0], [0], [1], [0, 0, 1, 1], [], []>} : vector<128x5xbf16>, vector<5x256xbf16>, vector<128x256xf32> -> vector<128x256xf32>
    %cst_11 = arith.constant dense<0x7F800000> : vector<256xf32>
    %14 = vector.multi_reduction <minimumf>, %13, %cst_11 [0] : vector<128x256xf32> to vector<256xf32>
    %15 = vector.shape_cast %14 : vector<256xf32> to vector<1x256xf32>
    %16 = tpu.iota {dimensions = array<i32: 0>} : vector<128x1xi32>
    %c128_i32_12 = arith.constant 128 : i32
    %17 = arith.muli %c0_i32_8, %c128_i32_12 : i32
    %18 = vector.broadcast %17 : i32 to vector<128x1xi32>
    %19 = arith.addi %16, %18 : vector<128x1xi32>
    %20 = vector.broadcast %15 : vector<1x256xf32> to vector<128x256xf32>
    %21 = arith.cmpf oeq, %13, %20 : vector<128x256xf32>
    %c128_i32_13 = arith.constant 128 : i32
    %22 = vector.shape_cast %19 : vector<128x1xi32> to vector<128x1xi32>
    %23 = vector.broadcast %22 : vector<128x1xi32> to vector<128x256xi32>
    %24 = vector.broadcast %c128_i32_13 : i32 to vector<128x256xi32>
    %25 = arith.select %21, %23, %24 : vector<128x256xi1>, vector<128x256xi32>
    %cst_14 = arith.constant dense<2147483647> : vector<256xi32>
    %26 = vector.multi_reduction <minsi>, %25, %cst_14 [0] : vector<128x256xi32> to vector<256xi32>
    %27 = vector.shape_cast %26 : vector<256xi32> to vector<1x256xi32>
    %28 = arith.cmpf olt, %15, %7 : vector<1x256xf32>
    %29 = arith.select %28, %15, %7 : vector<1x256xi1>, vector<1x256xf32>
    %30 = arith.select %28, %27, %8 : vector<1x256xi1>, vector<1x256xi32>
    %c1_i32 = arith.constant 1 : i32
    %c0_15 = arith.constant 0 : index
    %c0_16 = arith.constant 0 : index
    %c0_17 = arith.constant 0 : index
    %31 = vector.load %arg4[%c0_15, %c0_16, %c0_17] : memref<1x1x256xi32, #tpu.memory_space<vmem>>, vector<1x1x256xi32>
    %32 = vector.shape_cast %31 : vector<1x1x256xi32> to vector<1x256xi32>
    %33 = vector.shape_cast %30 : vector<1x256xi32> to vector<1x1x256xi32>
    tpu.vector_store %arg4[%c0_15, %c0_16, %c0_17], %33 {strides = array<i32>} : memref<1x1x256xi32, #tpu.memory_space<vmem>>, vector<1x1x256xi32>,
    return
  }
  func.func @transform_0(%arg0: i32, %arg1: i32) -> (i32, i32, i32) {
    %c0_i32 = arith.constant 0 : i32
    %c0_i32_0 = arith.constant 0 : i32
    return %arg0, %c0_i32, %arg1 : i32, i32, i32
  }
  func.func @transform_1(%arg0: i32, %arg1: i32) -> (i32, i32) {
    %c0_i32 = arith.constant 0 : i32
    %c0_i32_0 = arith.constant 0 : i32
    %c0_i32_1 = arith.constant 0 : i32
    return %c0_i32, %c0_i32_0 : i32, i32
  }
  func.func @transform_2(%arg0: i32, %arg1: i32) -> (i32, i32, i32) {
    %c0_i32 = arith.constant 0 : i32
    %c0_i32_0 = arith.constant 0 : i32
    return %arg0, %c0_i32, %arg1 : i32, i32, i32
  }
}

</mosaic_0001>

<llo_original>
// kernel: tpu_custom_call.1
$region0: #{tpu_custom_call.1}
  #allocation0 [shape = 'u32[]', space=smem, size = 0x4, offset = 0x4, fixed_abs, tag = 'smem constant byte address 0x4 - core index']
  #allocation1 [shape = 'u32[144,128]{1,0:T(1,128)}', space=vmem, size = 0x12000, scoped, tag = 'internal scratch']
  #allocation2 [shape = 'bf16[5,256]{1,0:T(8,128)(2,1)}', space=vmem, size = 0x1000, scoped, tag = 'scratch operand']
  %s0 = inlined_call_operand.vmem [shape: f32[2,4,256], index: 0, kind: input, shape index: {}]
  %s1 = inlined_call_operand.vmem [shape: bf16[128,5], index: 1, kind: input, shape index: {}]
  %s2 = inlined_call_operand.hbm [shape: s32[2,1,256], index: 2, kind: output, shape index: {}]
  %s3 = sld [smem:[#allocation0]]
  $region41: #{tpu_custom_call.1} parent=0
    _
  %s5 = ssub.s32 1, %s3
  %s6 = scalar_select 0, %s5, %s3
  $region1: #{tpu_custom_call.1} parent=0
    #allocation3 [shape = 'u8[2048]{0}', space=vmem, size = 0x800, scoped, tag = 'output window, operand 0']
    #allocation4 [shape = 's32[2]{0}', space=sflag, size = 0x8, scoped, tag = 'scoped memory for tpu_custom_call.1']
    %7 = vsyncpa [#allocation4], 0
    %s8 = scalar_lea.sflag [#allocation4], 1
    %9 = vsyncpa %s8, 0
    loop: start=0, step=1, limit=4
    $region2: #{tpu_custom_call.1} parent=1 // loop_pre_header
      _
    $region3: #{tpu_custom_call.1} parent=1 // loop_header
      %s11 = sphi 0, %s15
      %p12 = scmp.ge.s32.totalorder %s11, 4
      %s18 = sphi 0, %s30
      %s19 = sphi 0, %s26
      %s20 = sphi 0, %s18
      %s21 = sphi 0, %s19
      %s22 = sphi 0, %s20
      %s23 = sphi 0, %s21
      %s35 = sphi 0, %s37
      %s38 = sphi 0, %s35
      %s39 = sphi 0, %s38
      %s55 = sphi 0, %s39
      %s59 = sphi 0, %s59
      %s61 = sphi 0, %s59
      %s62 = sphi 0, %s61
      %s76 = sphi 0, %s62
      %s84 = sphi 0, %s86
      %s87 = sphi 0, %s84
      %s88 = sphi 0, %s87
      %s104 = sphi 0, %s88
    $region4: #{tpu_custom_call.1} parent=1 // loop_header_branch
      %14 = sbr.rel (%p12) target = $region8
    $region5: #{tpu_custom_call.1} parent=1 // loop_body
      %s16 = ssub.s32 %s11, 1
      %s17 = ssub.s32 %s11, 2
      %s24 = sadd.s32 1, %s19
      %p25 = scmp.ge.s32.totalorder %s24, 1
      %s26 = scalar_select %p25, 0, %s24
      %s27 = sadd.s32 1, %s18
      %s28 = scalar_select %p25, %s27, %s18
      %p29 = scmp.ge.s32.totalorder %s28, 2
      %s30 = scalar_select %p29, 0, %s28
      %s31 = ssub.s32 %s18, %s30
      %s32 = ssub.s32 %s19, %s26
      %s33 = sor.u32 %s31, %s32
      %p34 = scmp.eq.s32.totalorder %s33, 0
      %s36 = sadd.s32 %s35, 1
      %s37 = scalar_select %p34, %s35, %s36
      %p40 = pneg %p34
      %p41 = scmp.eq.s32.totalorder %s11, 1
      %p42 = por %p40, %p41
      %p43 = scmp.ne.s32.totalorder %s35, %s38
      %p44 = scmp.eq.s32.totalorder %s11, 0
      %p45 = por %p43, %p44
      %p46 = scmp.ne.s32.totalorder %s35, %s38
      %p47 = scmp.eq.s32.totalorder %s16, 1
      %p48 = por %p46, %p47
      %p49 = scmp.ne.s32.totalorder %s38, %s39
      %p50 = scmp.eq.s32.totalorder %s16, 0
      %p51 = por %p49, %p50
      %p52 = scmp.ne.s32.totalorder %s38, %s39
      %p53 = scmp.eq.s32.totalorder %s17, 1
      %p54 = por %p52, %p53
      %p56 = scmp.ne.s32.totalorder %s39, %s55
      %p57 = scmp.eq.s32.totalorder %s17, 0
      %p58 = por %p56, %p57
      %s60 = sadd.s32 %s59, 1
      %p63 = scmp.eq.s32.totalorder %s11, 1
      %p64 = scmp.ne.s32.totalorder %s59, %s61
      %p65 = scmp.eq.s32.totalorder %s11, 0
      %p66 = por %p64, %p65
      %p67 = scmp.ne.s32.totalorder %s59, %s61
      %p68 = scmp.eq.s32.totalorder %s16, 1
      %p69 = por %p67, %p68
      %p70 = scmp.ne.s32.totalorder %s61, %s62
      %p71 = scmp.eq.s32.totalorder %s16, 0
      %p72 = por %p70, %p71
      %p73 = scmp.ne.s32.totalorder %s61, %s62
      %p74 = scmp.eq.s32.totalorder %s17, 1
      %p75 = por %p73, %p74
      %p77 = scmp.ne.s32.totalorder %s62, %s76
      %p78 = scmp.eq.s32.totalorder %s17, 0
      %p79 = por %p77, %p78
      %s80 = ssub.s32 %s18, %s30
      %s81 = ssub.s32 %s19, %s26
      %s82 = sor.u32 %s80, %s81
      %p83 = scmp.eq.s32.totalorder %s82, 0
      %s85 = sadd.s32 %s84, 1
      %s86 = scalar_select %p83, %s84, %s85
      %p89 = pneg %p83
      %p90 = scmp.eq.s32.totalorder %s11, 1
      %p91 = por %p89, %p90
      %p92 = scmp.ne.s32.totalorder %s84, %s87
      %p93 = scmp.eq.s32.totalorder %s11, 0
      %p94 = por %p92, %p93
      %p95 = scmp.ne.s32.totalorder %s84, %s87
      %p96 = scmp.eq.s32.totalorder %s16, 1
      %p97 = por %p95, %p96
      %p98 = scmp.ne.s32.totalorder %s87, %s88
      %p99 = scmp.eq.s32.totalorder %s16, 0
      %p100 = por %p98, %p99
      %p101 = scmp.ne.s32.totalorder %s87, %s88
      %p102 = scmp.eq.s32.totalorder %s17, 1
      %p103 = por %p101, %p102
      %p105 = scmp.ne.s32.totalorder %s88, %s104
      %p106 = scmp.eq.s32.totalorder %s17, 0
      %p107 = por %p105, %p106
      %p108 = scmp.le.s32.totalorder 1, %s11
      %p109 = scmp.lt.s32.totalorder %s11, 3
      %p110 = pnand %p108, %p109
      %p111 = pneg %p110
      // Predicated region
      $region9: #{tpu_custom_call.1} parent=5 // pred_check
        _
      $region10: #{tpu_custom_call.1} parent=5 // pred_check_branch
        %113 = sbr.rel (%p110) target = $region12
      $region11: #{tpu_custom_call.1} parent=5 // pred_region
        %s114 = ssub.s32 %s11, 1
        // Predicated region
        $region13: #{tpu_custom_call.1} parent=11 // pred_check
          %p115 = pneg %p72
        $region14: #{tpu_custom_call.1} parent=11 // pred_check_branch
          %117 = sbr.rel (%p115) target = $region16
        $region15: #{tpu_custom_call.1} parent=11 // pred_region
          _
        $region16: #{tpu_custom_call.1} parent=11 // pred_fallthru
          _
      $region12: #{tpu_custom_call.1} parent=5 // pred_fallthru
        _
      %p118 = scmp.lt.s32.totalorder %s11, 2
      // Predicated region
      $region17: #{tpu_custom_call.1} parent=5 // pred_check
        %p119 = pneg %p118
      $region18: #{tpu_custom_call.1} parent=5 // pred_check_branch
        %121 = sbr.rel (%p119) target = $region20
      $region19: #{tpu_custom_call.1} parent=5 // pred_region
        // Predicated region
        $region21: #{tpu_custom_call.1} parent=19 // pred_check
          %p122 = pneg %p45
        $region22: #{tpu_custom_call.1} parent=19 // pred_check_branch
          %124 = sbr.rel (%p122) target = $region24
        $region23: #{tpu_custom_call.1} parent=19 // pred_region
          %s125 = smul.u32 2, %s19
          %p126 = scmp.lt.s32.totalorder %s18, 1
          %s127 = scalar_select %p126, %s18, 1
          %p128 = scmp.lt.s32.totalorder %s125, 1
          %s129 = scalar_select %p128, %s125, 1
          %s130 = smul.addr %s127, 2
          %s131 = sadd.s32 %s129, %s130
          %s132 = smul.addr %s131, 4
          %s133 = scalar_lea.vmem %s0, %s132
          %s134 = smul.u32 2, %s19
        $region24: #{tpu_custom_call.1} parent=19 // pred_fallthru
          _
      $region20: #{tpu_custom_call.1} parent=5 // pred_fallthru
        _
      %p135 = scmp.le.s32.totalorder 1, %s11
      %p136 = scmp.lt.s32.totalorder %s11, 3
      %p137 = pnand %p135, %p136
      %p138 = pneg %p137
      // Predicated region
      $region25: #{tpu_custom_call.1} parent=5 // pred_check
        _
      $region26: #{tpu_custom_call.1} parent=5 // pred_check_branch
        %140 = sbr.rel (%p137) target = $region28
      $region27: #{tpu_custom_call.1} parent=5 // pred_region
        %s141 = ssub.s32 %s11, 1
        %s142 = smul.u32 2, %s21
        %p143 = scmp.lt.s32.totalorder %s20, 1
        %s144 = scalar_select %p143, %s20, 1
        %p145 = scmp.lt.s32.totalorder %s142, 1
        %s146 = scalar_select %p145, %s142, 1
        %s147 = smul.addr %s144, 2
        %s148 = sadd.s32 %s146, %s147
        %s149 = smul.addr %s148, 4
        %s150 = scalar_lea.vmem %s0, %s149
        %p151 = pneg %p51
        %p152 = pneg %p48
        %p153 = pneg %p72
        %p154 = pneg %p69
        %p155 = pneg %p100
        %p156 = pneg %p97
        %s157 = sand.u32 %s87, 1
        %s158 = scalar_lea.sflag [#allocation4], %s157
        %s159 = sand.u32 %s87, 1
        %s160 = smul.addr %s159, 2
        %s161 = scalar_lea.vmem [#allocation3], %s160
        %s162 = smul.u32 2, %s21
        %p163 = scmp.lt.s32.totalorder %s20, 1
        %s164 = scalar_select %p163, %s20, 1
        %p165 = scmp.lt.s32.totalorder %s162, 1
        %s166 = scalar_select %p165, %s162, 1
        %s167 = smul.addr %s164, 2
        %s168 = sadd.s32 %s166, %s167
        %s169 = smul.addr %s168, 4
        %s170 = scalar_lea.vmem %s0, %s169
        %s171 = smul.u32 2, %s21
        %s172 = smul.u32 2, %s21
        %v175 = vld [vmem:[%s170] sm:$0xff]
        %v177 = vcombine.high %v175, %v175
        %v179 = vpack.c.bf16 %v175, %v175
        %v180 = vpack.c.bf16 %v177, %v177
        %v183 = vunpack.c.l.b16 %v179
        %v184 = vunpack.c.l.b16 %v180
        %v185 = vpack.c.b16 %v184, %v183
        %187 = vst [vmem:[#allocation2] sm:$0x33] %v185
        %vm188 = vcmask 1042434
        %vm189 = vsmask.f32 2304
        %vm190 = vmand %vm188, %vm189
        %vm191 = vcmask 1046534
        %vm192 = vsmask.f32 6400
        %vm193 = vmand %vm191, %vm192
        %vm194 = vmor %vm193, %vm190
        %v195 = vld [vmem:[#allocation2] sm:$0x44]
        %v196 = vsel %vm194, 1065369472, %v195
        %197 = vst [vmem:[#allocation2] sm:$0x44] %v196
        %v198 = vld [vmem:[#allocation2] sm:$0x77]
        %v199 = vld [vmem:[%s1] sm:$0xf]
        %v200 = vld [vmem:[%s1 + $0x4] sm:$0xf]
        %v201 = vld [vmem:[%s1 + $0x8] sm:$0xf]
        %v202 = vld [vmem:[%s1 + $0xc] sm:$0xf]
        %v203 = vld [vmem:[%s1 + $0x10] sm:$0xf]
        %v204 = vld [vmem:[%s1 + $0x14] sm:$0xf]
        %v205 = vld [vmem:[%s1 + $0x18] sm:$0xf]
        %v206 = vld [vmem:[%s1 + $0x1c] sm:$0xf]
        %v207 = vld [vmem:[%s1 + $0x20] sm:$0xf]
        %v208 = vld [vmem:[%s1 + $0x24] sm:$0xf]
        %v209 = vld [vmem:[%s1 + $0x28] sm:$0xf]
        %v210 = vld [vmem:[%s1 + $0x2c] sm:$0xf]
        %v211 = vld [vmem:[%s1 + $0x30] sm:$0xf]
        %v212 = vld [vmem:[%s1 + $0x34] sm:$0xf]
        %v213 = vld [vmem:[%s1 + $0x38] sm:$0xf]
        %v214 = vld [vmem:[%s1 + $0x3c] sm:$0xf]
        %v231 = vunpack.c.l.b16 %v199
        %v232 = vunpack.c.l.b16 %v200
        %v233 = vunpack.c.l.b16 %v201
        %v234 = vunpack.c.l.b16 %v202
        %v235 = vunpack.c.l.b16 %v203
        %v236 = vunpack.c.l.b16 %v204
        %v237 = vunpack.c.l.b16 %v205
        %v238 = vunpack.c.l.b16 %v206
        %v239 = vunpack.c.l.b16 %v207
        %v240 = vunpack.c.l.b16 %v208
        %v241 = vunpack.c.l.b16 %v209
        %v242 = vunpack.c.l.b16 %v210
        %v243 = vunpack.c.l.b16 %v211
        %v244 = vunpack.c.l.b16 %v212
        %v245 = vunpack.c.l.b16 %v213
        %v246 = vunpack.c.l.b16 %v214
        %v247 = vpack.c.b16 %v232, %v231
        %v248 = vpack.c.b16 %v234, %v233
        %v249 = vpack.c.b16 %v236, %v235
        %v250 = vpack.c.b16 %v238, %v237
        %v251 = vpack.c.b16 %v240, %v239
        %v252 = vpack.c.b16 %v242, %v241
        %v253 = vpack.c.b16 %v244, %v243
        %v254 = vpack.c.b16 %v246, %v245
        %v256 = vunpack.c.l.b16 %v198
        %v257 = vunpack.c.h.b16 %v198
        %v258 = vpack.c.b16 %v256, %v256
        %v259 = vpack.c.b16 %v257, %v257
        %vm260 = vcmask 39936
        %v262 = vsel %vm260, %v247, 0
        %v265 = vsel %vm260, %v248, 0
        %v268 = vsel %vm260, %v249, 0
        %v271 = vsel %vm260, %v250, 0
        %v274 = vsel %vm260, %v251, 0
        %v277 = vsel %vm260, %v252, 0
        %v280 = vsel %vm260, %v253, 0
        %v283 = vsel %vm260, %v254, 0
        %vm285 = vcmask 1041408
        %vm286 = vcmask 1042432
        %v287 = vsel %vm285, 4294967295, 65535
        %v288 = vsel %vm286, %v287, 0
        %v290 = vand.u32 %v258, %v288
        %v293 = vand.u32 %v259, %v288
        %295 = vmatprep.subr.bf16.mxu0 %v293
        %296 = vmatpush1.bf16.msra.mxu0 %v290
        %297 = vmatprep.subr.bf16.mxu0 0
        %298 = vmatpush1.bf16.msra.mxu0 0
        %299 = vmatprep.subr.bf16.mxu0 0
        %300 = vmatpush1.bf16.msra.mxu0 0
        %301 = vmatprep.subr.bf16.mxu0 0
        %302 = vmatpush1.bf16.msra.mxu0 0
        %303 = vmatprep.subr.bf16.mxu0 0
        %304 = vmatpush1.bf16.msra.mxu0 0
        %305 = vmatprep.subr.bf16.mxu0 0
        %306 = vmatpush1.bf16.msra.mxu0 0
        %307 = vmatprep.subr.bf16.mxu0 0
        %308 = vmatpush1.bf16.msra.mxu0 0
        %309 = vmatprep.subr.bf16.mxu0 0
        %310 = vmatpush1.bf16.msra.mxu0 0
        %311 = vmatprep.subr.bf16.mxu0 0
        %312 = vmatpush1.bf16.msra.mxu0 0
        %313 = vmatprep.subr.bf16.mxu0 0
        %314 = vmatpush1.bf16.msra.mxu0 0
        %315 = vmatprep.subr.bf16.mxu0 0
        %316 = vmatpush1.bf16.msra.mxu0 0
        %317 = vmatprep.subr.bf16.mxu0 0
        %318 = vmatpush1.bf16.msra.mxu0 0
        %319 = vmatprep.subr.bf16.mxu0 0
        %320 = vmatpush1.bf16.msra.mxu0 0
        %321 = vmatprep.subr.bf16.mxu0 0
        %322 = vmatpush1.bf16.msra.mxu0 0
        %323 = vmatprep.subr.bf16.mxu0 0
        %324 = vmatpush1.bf16.msra.mxu0 0
        %325 = vmatprep.subr.bf16.mxu0 0
        %326 = vmatpush1.bf16.msra.mxu0 0
        %327 = vmatprep.mubr.bf16.mxu0 0
        %328 = vmatmul.mubr.bf16.gmra.mrb[0].mxu0 %v262
        %v329 = vpop.f32.mrb[0].mxu0
        %v330 = vadd.f32 0.0, %v329
        %v331 = vpop.f32.mrb[0].mxu0
        %v332 = vadd.f32 0.0, %v331
        %v333 = vpop.f32.mrb[0].mxu0
        %v334 = vadd.f32 0.0, %v333
        %v335 = vpop.f32.mrb[0].mxu0
        %v336 = vadd.f32 0.0, %v335
        %337 = vmatprep.mubr.bf16.mxu0 0
        %338 = vmatmul.mubr.bf16.gmra.mrb[0].mxu0 %v265
        %v339 = vpop.f32.mrb[0].mxu0
        %v340 = vadd.f32 0.0, %v339
        %v341 = vpop.f32.mrb[0].mxu0
        %v342 = vadd.f32 0.0, %v341
        %v343 = vpop.f32.mrb[0].mxu0
        %v344 = vadd.f32 0.0, %v343
        %v345 = vpop.f32.mrb[0].mxu0
        %v346 = vadd.f32 0.0, %v345
        %347 = vmatprep.mubr.bf16.mxu0 0
        %348 = vmatmul.mubr.bf16.gmra.mrb[0].mxu0 %v268
        %v349 = vpop.f32.mrb[0].mxu0
        %v350 = vadd.f32 0.0, %v349
        %v351 = vpop.f32.mrb[0].mxu0
        %v352 = vadd.f32 0.0, %v351
        %v353 = vpop.f32.mrb[0].mxu0
        %v354 = vadd.f32 0.0, %v353
        %v355 = vpop.f32.mrb[0].mxu0
        %v356 = vadd.f32 0.0, %v355
        %357 = vmatprep.mubr.bf16.mxu0 0
        %358 = vmatmul.mubr.bf16.gmra.mrb[0].mxu0 %v271
        %v359 = vpop.f32.mrb[0].mxu0
        %v360 = vadd.f32 0.0, %v359
        %v361 = vpop.f32.mrb[0].mxu0
        %v362 = vadd.f32 0.0, %v361
        %v363 = vpop.f32.mrb[0].mxu0
        %v364 = vadd.f32 0.0, %v363
        %v365 = vpop.f32.mrb[0].mxu0
        %v366 = vadd.f32 0.0, %v365
        %367 = vmatprep.mubr.bf16.mxu0 0
        %368 = vmatmul.mubr.bf16.gmra.mrb[0].mxu0 %v274
        %v369 = vpop.f32.mrb[0].mxu0
        %v370 = vadd.f32 0.0, %v369
        %v371 = vpop.f32.mrb[0].mxu0
        %v372 = vadd.f32 0.0, %v371
        %v373 = vpop.f32.mrb[0].mxu0
        %v374 = vadd.f32 0.0, %v373
        %v375 = vpop.f32.mrb[0].mxu0
        %v376 = vadd.f32 0.0, %v375
        %377 = vmatprep.mubr.bf16.mxu0 0
        %378 = vmatmul.mubr.bf16.gmra.mrb[0].mxu0 %v277
        %v379 = vpop.f32.mrb[0].mxu0
        %v380 = vadd.f32 0.0, %v379
        %v381 = vpop.f32.mrb[0].mxu0
        %v382 = vadd.f32 0.0, %v381
        %v383 = vpop.f32.mrb[0].mxu0
        %v384 = vadd.f32 0.0, %v383
        %v385 = vpop.f32.mrb[0].mxu0
        %v386 = vadd.f32 0.0, %v385
        %387 = vmatprep.mubr.bf16.mxu0 0
        %388 = vmatmul.mubr.bf16.gmra.mrb[0].mxu0 %v280
        %v389 = vpop.f32.mrb[0].mxu0
        %v390 = vadd.f32 0.0, %v389
        %v391 = vpop.f32.mrb[0].mxu0
        %v392 = vadd.f32 0.0, %v391
        %v393 = vpop.f32.mrb[0].mxu0
        %v394 = vadd.f32 0.0, %v393
        %v395 = vpop.f32.mrb[0].mxu0
        %v396 = vadd.f32 0.0, %v395
        %397 = vmatprep.mubr.bf16.mxu0 0
        %398 = vmatmul.mubr.bf16.gmra.mrb[0].mxu0 %v283
        %v399 = vpop.f32.mrb[0].mxu0
        %v400 = vadd.f32 0.0, %v399
        %v401 = vpop.f32.mrb[0].mxu0
        %v402 = vadd.f32 0.0, %v401
        %v403 = vpop.f32.mrb[0].mxu0
        %v404 = vadd.f32 0.0, %v403
        %v405 = vpop.f32.mrb[0].mxu0
        %v406 = vadd.f32 0.0, %v405
        %407 = vdwg.mxu0
        %v408 = vmin.f32 %v330, %v340
        %v409 = vmin.f32 %v334, %v344
        %v410 = vmin.f32 %v408, %v350
        %v411 = vmin.f32 %v409, %v354
        %v412 = vmin.f32 %v410, %v360
        %v413 = vmin.f32 %v411, %v364
        %v414 = vmin.f32 %v412, %v370
        %v415 = vmin.f32 %v413, %v374
        %v416 = vmin.f32 %v414, %v380
        %v417 = vmin.f32 %v415, %v384
        %v418 = vmin.f32 %v416, %v390
        %v419 = vmin.f32 %v417, %v394
        %v420 = vmin.f32 %v418, %v400
        %v421 = vmin.f32 %v419, %v404
        %v422 = vmin.f32 %v420, %v421
        %v423 = vrot.slane %v422, 4
        %v424 = vmin.f32 %v422, %v423
        %v425 = vrot.slane %v424, 2
        %v426 = vmin.f32 %v424, %v425
        %v427 = vrot.slane %v426, 1
        %v428 = vmin.f32 %v426, %v427
        %v429 = vmin.f32 %v332, %v342
        %v430 = vmin.f32 %v336, %v346
        %v431 = vmin.f32 %v429, %v352
        %v432 = vmin.f32 %v430, %v356
        %v433 = vmin.f32 %v431, %v362
        %v434 = vmin.f32 %v432, %v366
        %v435 = vmin.f32 %v433, %v372
        %v436 = vmin.f32 %v434, %v376
        %v437 = vmin.f32 %v435, %v382
        %v438 = vmin.f32 %v436, %v386
        %v439 = vmin.f32 %v437, %v392
        %v440 = vmin.f32 %v438, %v396
        %v441 = vmin.f32 %v439, %v402
        %v442 = vmin.f32 %v440, %v406
        %v443 = vmin.f32 %v441, %v442
        %v444 = vrot.slane %v443, 4
        %v445 = vmin.f32 %v443, %v444
        %v446 = vrot.slane %v445, 2
        %v447 = vmin.f32 %v445, %v446
        %v448 = vrot.slane %v447, 1
        %v449 = vmin.f32 %v447, %v448
        %v450 = vlaneseq
        %v451 = vshrl.u32 %v450, 7
        %v452 = vadd.s32 %v451, 8
        %v453 = vadd.s32 %v451, 16
        %v454 = vadd.s32 %v451, 24
        %v455 = vadd.s32 %v451, 32
        %v456 = vadd.s32 %v451, 40
        %v457 = vadd.s32 %v451, 48
        %v458 = vadd.s32 %v451, 56
        %v459 = vadd.s32 %v451, 64
        %v460 = vadd.s32 %v451, 72
        %v461 = vadd.s32 %v451, 80
        %v462 = vadd.s32 %v451, 88
        %v463 = vadd.s32 %v451, 96
        %v464 = vadd.s32 %v451, 104
        %v465 = vadd.s32 %v451, 112
        %v466 = vadd.s32 %v451, 120
        %vm467 = vcmp.eq.f32.partialorder %v330, %v428
        %vm468 = vcmp.eq.f32.partialorder %v332, %v449
        %vm469 = vcmp.eq.f32.partialorder %v334, %v428
        %vm470 = vcmp.eq.f32.partialorder %v336, %v449
        %vm471 = vcmp.eq.f32.partialorder %v340, %v428
        %vm472 = vcmp.eq.f32.partialorder %v342, %v449
        %vm473 = vcmp.eq.f32.partialorder %v344, %v428
        %vm474 = vcmp.eq.f32.partialorder %v346, %v449
        %vm475 = vcmp.eq.f32.partialorder %v350, %v428
        %vm476 = vcmp.eq.f32.partialorder %v352, %v449
        %vm477 = vcmp.eq.f32.partialorder %v354, %v428
        %vm478 = vcmp.eq.f32.partialorder %v356, %v449
        %vm479 = vcmp.eq.f32.partialorder %v360, %v428
        %vm480 = vcmp.eq.f32.partialorder %v362, %v449
        %vm481 = vcmp.eq.f32.partialorder %v364, %v428
        %vm482 = vcmp.eq.f32.partialorder %v366, %v449
        %vm483 = vcmp.eq.f32.partialorder %v370, %v428
        %vm484 = vcmp.eq.f32.partialorder %v372, %v449
        %vm485 = vcmp.eq.f32.partialorder %v374, %v428
        %vm486 = vcmp.eq.f32.partialorder %v376, %v449
        %vm487 = vcmp.eq.f32.partialorder %v380, %v428
        %vm488 = vcmp.eq.f32.partialorder %v382, %v449
        %vm489 = vcmp.eq.f32.partialorder %v384, %v428
        %vm490 = vcmp.eq.f32.partialorder %v386, %v449
        %vm491 = vcmp.eq.f32.partialorder %v390, %v428
        %vm492 = vcmp.eq.f32.partialorder %v392, %v449
        %vm493 = vcmp.eq.f32.partialorder %v394, %v428
        %vm494 = vcmp.eq.f32.partialorder %v396, %v449
        %vm495 = vcmp.eq.f32.partialorder %v400, %v428
        %vm496 = vcmp.eq.f32.partialorder %v402, %v449
        %vm497 = vcmp.eq.f32.partialorder %v404, %v428
        %vm498 = vcmp.eq.f32.partialorder %v406, %v449
        %v499 = vsel %vm467, %v451, 128
        %v500 = vsel %vm468, %v451, 128
        %v501 = vsel %vm469, %v452, 128
        %v502 = vsel %vm470, %v452, 128
        %v503 = vsel %vm471, %v453, 128
        %v504 = vsel %vm472, %v453, 128
        %v505 = vsel %vm473, %v454, 128
        %v506 = vsel %vm474, %v454, 128
        %v507 = vsel %vm475, %v455, 128
        %v508 = vsel %vm476, %v455, 128
        %v509 = vsel %vm477, %v456, 128
        %v510 = vsel %vm478, %v456, 128
        %v511 = vsel %vm479, %v457, 128
        %v512 = vsel %vm480, %v457, 128
        %v513 = vsel %vm481, %v458, 128
        %v514 = vsel %vm482, %v458, 128
        %v515 = vsel %vm483, %v459, 128
        %v516 = vsel %vm484, %v459, 128
        %v517 = vsel %vm485, %v460, 128
        %v518 = vsel %vm486, %v460, 128
        %v519 = vsel %vm487, %v461, 128
        %v520 = vsel %vm488, %v461, 128
        %v521 = vsel %vm489, %v462, 128
        %v522 = vsel %vm490, %v462, 128
        %v523 = vsel %vm491, %v463, 128
        %v524 = vsel %vm492, %v463, 128
        %v525 = vsel %vm493, %v464, 128
        %v526 = vsel %vm494, %v464, 128
        %v527 = vsel %vm495, %v465, 128
        %v528 = vsel %vm496, %v465, 128
        %v529 = vsel %vm497, %v466, 128
        %v530 = vsel %vm498, %v466, 128
        %vm531 = vcmp.lt.s32.totalorder %v499, %v503
        %v532 = vsel %vm531, %v499, %v503
        %vm533 = vcmp.lt.s32.totalorder %v501, %v505
        %v534 = vsel %vm533, %v501, %v505
        %vm535 = vcmp.lt.s32.totalorder %v532, %v507
        %v536 = vsel %vm535, %v532, %v507
        %vm537 = vcmp.lt.s32.totalorder %v534, %v509
        %v538 = vsel %vm537, %v534, %v509
        %vm539 = vcmp.lt.s32.totalorder %v536, %v511
        %v540 = vsel %vm539, %v536, %v511
        %vm541 = vcmp.lt.s32.totalorder %v538, %v513
        %v542 = vsel %vm541, %v538, %v513
        %vm543 = vcmp.lt.s32.totalorder %v540, %v515
        %v544 = vsel %vm543, %v540, %v515
        %vm545 = vcmp.lt.s32.totalorder %v542, %v517
        %v546 = vsel %vm545, %v542, %v517
        %vm547 = vcmp.lt.s32.totalorder %v544, %v519
        %v548 = vsel %vm547, %v544, %v519
        %vm549 = vcmp.lt.s32.totalorder %v546, %v521
        %v550 = vsel %vm549, %v546, %v521
        %vm551 = vcmp.lt.s32.totalorder %v548, %v523
        %v552 = vsel %vm551, %v548, %v523
        %vm553 = vcmp.lt.s32.totalorder %v550, %v525
        %v554 = vsel %vm553, %v550, %v525
        %vm555 = vcmp.lt.s32.totalorder %v552, %v527
        %v556 = vsel %vm555, %v552, %v527
        %vm557 = vcmp.lt.s32.totalorder %v554, %v529
        %v558 = vsel %vm557, %v554, %v529
        %vm559 = vcmp.lt.s32.totalorder %v556, %v558
        %v560 = vsel %vm559, %v556, %v558
        %v561 = vrot.slane %v560, 4
        %vm562 = vcmp.lt.s32.totalorder %v560, %v561
        %v563 = vsel %vm562, %v560, %v561
        %v564 = vrot.slane %v563, 2
        %vm565 = vcmp.lt.s32.totalorder %v563, %v564
        %v566 = vsel %vm565, %v563, %v564
        %v567 = vrot.slane %v566, 1
        %vm568 = vcmp.lt.s32.totalorder %v566, %v567
        %v569 = vsel %vm568, %v566, %v567
        %vm570 = vcmp.lt.s32.totalorder %v500, %v504
        %v571 = vsel %vm570, %v500, %v504
        %vm572 = vcmp.lt.s32.totalorder %v502, %v506
        %v573 = vsel %vm572, %v502, %v506
        %vm574 = vcmp.lt.s32.totalorder %v571, %v508
        %v575 = vsel %vm574, %v571, %v508
        %vm576 = vcmp.lt.s32.totalorder %v573, %v510
        %v577 = vsel %vm576, %v573, %v510
        %vm578 = vcmp.lt.s32.totalorder %v575, %v512
        %v579 = vsel %vm578, %v575, %v512
        %vm580 = vcmp.lt.s32.totalorder %v577, %v514
        %v581 = vsel %vm580, %v577, %v514
        %vm582 = vcmp.lt.s32.totalorder %v579, %v516
        %v583 = vsel %vm582, %v579, %v516
        %vm584 = vcmp.lt.s32.totalorder %v581, %v518
        %v585 = vsel %vm584, %v581, %v518
        %vm586 = vcmp.lt.s32.totalorder %v583, %v520
        %v587 = vsel %vm586, %v583, %v520
        %vm588 = vcmp.lt.s32.totalorder %v585, %v522
        %v589 = vsel %vm588, %v585, %v522
        %vm590 = vcmp.lt.s32.totalorder %v587, %v524
        %v591 = vsel %vm590, %v587, %v524
        %vm592 = vcmp.lt.s32.totalorder %v589, %v526
        %v593 = vsel %vm592, %v589, %v526
        %vm594 = vcmp.lt.s32.totalorder %v591, %v528
        %v595 = vsel %vm594, %v591, %v528
        %vm596 = vcmp.lt.s32.totalorder %v593, %v530
        %v597 = vsel %vm596, %v593, %v530
        %vm598 = vcmp.lt.s32.totalorder %v595, %v597
        %v599 = vsel %vm598, %v595, %v597
        %v600 = vrot.slane %v599, 4
        %vm601 = vcmp.lt.s32.totalorder %v599, %v600
        %v602 = vsel %vm601, %v599, %v600
        %v603 = vrot.slane %v602, 2
        %vm604 = vcmp.lt.s32.totalorder %v602, %v603
        %v605 = vsel %vm604, %v602, %v603
        %v606 = vrot.slane %v605, 1
        %vm607 = vcmp.lt.s32.totalorder %v605, %v606
        %v608 = vsel %vm607, %v605, %v606
        %vm609 = vcmp.lt.f32.partialorder %v428, inf
        %vm610 = vcmp.lt.f32.partialorder %v449, inf
        %v611 = vsel %vm609, %v569, 0
        %v612 = vsel %vm610, %v608, 0
        %v613 = vcombine.low %v611, %v612
        %v615 = vunpack.c.l.s4 1966171168
        %v616 = vunpack.c.0.s8 %v615
        %v617 = vlaneseq
        %v618 = vshrl.u32 %v617, 7
        %v619 = vsub.s32 %v616, %v618
        %v620 = vrot.slane %v613, %v619
        %v622 = vunpack.c.l.s4 1966171168
        %v623 = vunpack.c.0.s8 %v622
        %v624 = vlaneseq
        %v625 = vshrl.u32 %v624, 7
        %v626 = vsub.s32 %v623, %v625
        %v627 = vrot.slane %v620, %v626
        %v628 = vlaneseq
        %vm629 = vcmp.ge.s32.totalorder %v628, 0
        %vm630 = vcmp.lt.s32.totalorder %v628, 256
        %vm631 = vmand %vm629, %vm630
        %632 = vst.msk [vmem:[%s161] sm:$0x3] %vm631, %v627
        %s633 = sand.u32 %s87, 1
        %s634 = scalar_lea.sflag [#allocation4], %s633
        %s635 = sand.u32 %s87, 1
        %s636 = smul.addr %s635, 2
        %s637 = scalar_lea.vmem [#allocation3], %s636
        // Predicated region
        $region29: #{tpu_custom_call.1} parent=27 // pred_check
          %p638 = pneg %p97
        $region30: #{tpu_custom_call.1} parent=27 // pred_check_branch
          %640 = sbr.rel (%p638) target = $region32
        $region31: #{tpu_custom_call.1} parent=27 // pred_region
          %s641 = smul.u32 2, %s21
          %s643 = ssub.s32 32, 32
          %644 = vsyncadd %s634, %s643
          %s645 = smul.addr %s20, 2
          %s646 = sadd.s32 %s641, %s645
          %s647 = smul.addr %s646, 16
          %s648 = scalar_lea.hbm %s2, %s647
          %s650 = sshll.u32 %s637, 4
          %s651 = int_to_ptr.vmem [resolvable:$true] %s650
          %653 = dma.vmem_to_hbm [thread:$0]  %s651, 32, %s648, %s634
        $region32: #{tpu_custom_call.1} parent=27 // pred_fallthru
          _
      $region28: #{tpu_custom_call.1} parent=5 // pred_fallthru
        _
      %p654 = scmp.le.s32.totalorder 2, %s11
      // Predicated region
      $region33: #{tpu_custom_call.1} parent=5 // pred_check
        %p655 = pneg %p654
      $region34: #{tpu_custom_call.1} parent=5 // pred_check_branch
        %657 = sbr.rel (%p655) target = $region36
      $region35: #{tpu_custom_call.1} parent=5 // pred_region
        %s658 = ssub.s32 %s11, 2
        // Predicated region
        $region37: #{tpu_custom_call.1} parent=35 // pred_check
          %p659 = pneg %p103
        $region38: #{tpu_custom_call.1} parent=35 // pred_check_branch
          %661 = sbr.rel (%p659) target = $region40
        $region39: #{tpu_custom_call.1} parent=35 // pred_region
          %s662 = sand.u32 %s88, 1
          %s663 = scalar_lea.sflag [#allocation4], %s662
          %s664 = sand.u32 %s88, 1
          %s665 = smul.addr %s664, 2
          %s666 = scalar_lea.vmem [#allocation3], %s665
          %667 = dma.done %s663, 32
        $region40: #{tpu_custom_call.1} parent=35 // pred_fallthru
          _
      $region36: #{tpu_custom_call.1} parent=5 // pred_fallthru
        _
    $region6: #{tpu_custom_call.1} parent=1 // loop_footer
      %s15 = sadd.s32 1, %s11
    $region7: #{tpu_custom_call.1} parent=1 // loop_footer_branch
      %10 = sbr.rel target = $region3
    $region8: #{tpu_custom_call.1} parent=1 // loop_exit
      _
    %668 = vsyncpa [#allocation4], 1
    %s669 = scalar_lea.sflag [#allocation4], 1
    %670 = vsyncpa %s669, 1

// kernel: tpu_custom_call.1
$region0: #{tpu_custom_call.1}
  #allocation0 [shape = 'u32[]', space=smem, size = 0x4, offset = 0x4, fixed_abs, tag = 'smem constant byte address 0x4 - core index']
  #allocation1 [shape = 'u32[144,128]{1,0:T(1,128)}', space=vmem, size = 0x12000, scoped, tag = 'internal scratch']
  #allocation2 [shape = 'bf16[5,256]{1,0:T(8,128)(2,1)}', space=vmem, size = 0x1000, scoped, tag = 'scratch operand']
  %s0 = inlined_call_operand.vmem [shape: f32[2,4,256], index: 0, kind: input, shape index: {}]
  %s1 = inlined_call_operand.vmem [shape: bf16[128,5], index: 1, kind: input, shape index: {}]
  %s2 = inlined_call_operand.hbm [shape: s32[2,1,256], index: 2, kind: output, shape index: {}]
  %s3 = sld [smem:[#allocation0]]
  $region41: #{tpu_custom_call.1} parent=0
    _
  %s5 = ssub.s32 1, %s3
  %s6 = scalar_select 0, %s5, %s3
  $region1: #{tpu_custom_call.1} parent=0
    #allocation3 [shape = 'u8[2048]{0}', space=vmem, size = 0x800, scoped, tag = 'output window, operand 0']
    #allocation4 [shape = 's32[2]{0}', space=sflag, size = 0x8, scoped, tag = 'scoped memory for tpu_custom_call.1']
    %7 = vsyncpa [#allocation4], 0
    %s8 = scalar_lea.sflag [#allocation4], 1
    %9 = vsyncpa %s8, 0
    loop: start=0, step=1, limit=4
    $region2: #{tpu_custom_call.1} parent=1 // loop_pre_header
      _
    $region3: #{tpu_custom_call.1} parent=1 // loop_header
      %s11 = sphi 0, %s15
      %p12 = scmp.ge.s32.totalorder %s11, 4
      %s18 = sphi 0, %s30
      %s19 = sphi 0, %s26
      %s20 = sphi 0, %s18
      %s21 = sphi 0, %s19
      %s22 = sphi 0, %s20
      %s23 = sphi 0, %s21
      %s35 = sphi 0, %s37
      %s38 = sphi 0, %s35
      %s39 = sphi 0, %s38
      %s55 = sphi 0, %s39
      %s59 = sphi 0, %s59
      %s61 = sphi 0, %s59
      %s62 = sphi 0, %s61
      %s76 = sphi 0, %s62
      %s84 = sphi 0, %s86
      %s87 = sphi 0, %s84
      %s88 = sphi 0, %s87
      %s104 = sphi 0, %s88
    $region4: #{tpu_custom_call.1} parent=1 // loop_header_branch
      %14 = sbr.rel (%p12) target = $region8
    $region5: #{tpu_custom_call.1} parent=1 // loop_body
      %s16 = ssub.s32 %s11, 1
      %s17 = ssub.s32 %s11, 2
      %s24 = sadd.s32 1, %s19
      %p25 = scmp.ge.s32.totalorder %s24, 1
      %s26 = scalar_select %p25, 0, %s24
      %s27 = sadd.s32 1, %s18
      %s28 = scalar_select %p25, %s27, %s18
      %p29 = scmp.ge.s32.totalorder %s28, 2
      %s30 = scalar_select %p29, 0, %s28
      %s31 = ssub.s32 %s18, %s30
      %s32 = ssub.s32 %s19, %s26
      %s33 = sor.u32 %s31, %s32
      %p34 = scmp.eq.s32.totalorder %s33, 0
      %s36 = sadd.s32 %s35, 1
      %s37 = scalar_select %p34, %s35, %s36
      %p40 = pneg %p34
      %p41 = scmp.eq.s32.totalorder %s11, 1
      %p42 = por %p40, %p41
      %p43 = scmp.ne.s32.totalorder %s35, %s38
      %p44 = scmp.eq.s32.totalorder %s11, 0
      %p45 = por %p43, %p44
      %p46 = scmp.ne.s32.totalorder %s35, %s38
      %p47 = scmp.eq.s32.totalorder %s16, 1
      %p48 = por %p46, %p47
      %p49 = scmp.ne.s32.totalorder %s38, %s39
      %p50 = scmp.eq.s32.totalorder %s16, 0
      %p51 = por %p49, %p50
      %p52 = scmp.ne.s32.totalorder %s38, %s39
      %p53 = scmp.eq.s32.totalorder %s17, 1
      %p54 = por %p52, %p53
      %p56 = scmp.ne.s32.totalorder %s39, %s55
      %p57 = scmp.eq.s32.totalorder %s17, 0
      %p58 = por %p56, %p57
      %s60 = sadd.s32 %s59, 1
      %p63 = scmp.eq.s32.totalorder %s11, 1
      %p64 = scmp.ne.s32.totalorder %s59, %s61
      %p65 = scmp.eq.s32.totalorder %s11, 0
      %p66 = por %p64, %p65
      %p67 = scmp.ne.s32.totalorder %s59, %s61
      %p68 = scmp.eq.s32.totalorder %s16, 1
      %p69 = por %p67, %p68
      %p70 = scmp.ne.s32.totalorder %s61, %s62
      %p71 = scmp.eq.s32.totalorder %s16, 0
      %p72 = por %p70, %p71
      %p73 = scmp.ne.s32.totalorder %s61, %s62
      %p74 = scmp.eq.s32.totalorder %s17, 1
      %p75 = por %p73, %p74
      %p77 = scmp.ne.s32.totalorder %s62, %s76
      %p78 = scmp.eq.s32.totalorder %s17, 0
      %p79 = por %p77, %p78
      %s80 = ssub.s32 %s18, %s30
      %s81 = ssub.s32 %s19, %s26
      %s82 = sor.u32 %s80, %s81
      %p83 = scmp.eq.s32.totalorder %s82, 0
      %s85 = sadd.s32 %s84, 1
      %s86 = scalar_select %p83, %s84, %s85
      %p89 = pneg %p83
      %p90 = scmp.eq.s32.totalorder %s11, 1
      %p91 = por %p89, %p90
      %p92 = scmp.ne.s32.totalorder %s84, %s87
      %p93 = scmp.eq.s32.totalorder %s11, 0
      %p94 = por %p92, %p93
      %p95 = scmp.ne.s32.totalorder %s84, %s87
      %p96 = scmp.eq.s32.totalorder %s16, 1
      %p97 = por %p95, %p96
      %p98 = scmp.ne.s32.totalorder %s87, %s88
      %p99 = scmp.eq.s32.totalorder %s16, 0
      %p100 = por %p98, %p99
      %p101 = scmp.ne.s32.totalorder %s87, %s88
      %p102 = scmp.eq.s32.totalorder %s17, 1
      %p103 = por %p101, %p102
      %p105 = scmp.ne.s32.totalorder %s88, %s104
      %p106 = scmp.eq.s32.totalorder %s17, 0
      %p107 = por %p105, %p106
      %p108 = scmp.le.s32.totalorder 1, %s11
      %p109 = scmp.lt.s32.totalorder %s11, 3
      %p110 = pnand %p108, %p109
      %p111 = pneg %p110
      // Predicated region
      $region9: #{tpu_custom_call.1} parent=5 // pred_check
        _
      $region10: #{tpu_custom_call.1} parent=5 // pred_check_branch
        %113 = sbr.rel (%p110) target = $region12
      $region11: #{tpu_custom_call.1} parent=5 // pred_region
        %s114 = ssub.s32 %s11, 1
        // Predicated region
        $region13: #{tpu_custom_call.1} parent=11 // pred_check
          %p115 = pneg %p72
        $region14: #{tpu_custom_call.1} parent=11 // pred_check_branch
          %117 = sbr.rel (%p115) target = $region16
        $region15: #{tpu_custom_call.1} parent=11 // pred_region
          _
        $region16: #{tpu_custom_call.1} parent=11 // pred_fallthru
          _
      $region12: #{tpu_custom_call.1} parent=5 // pred_fallthru
        _
      %p118 = scmp.lt.s32.totalorder %s11, 2
      // Predicated region
      $region17: #{tpu_custom_call.1} parent=5 // pred_check
        %p119 = pneg %p118
      $region18: #{tpu_custom_call.1} parent=5 // pred_check_branch
        %121 = sbr.rel (%p119) target = $region20
      $region19: #{tpu_custom_call.1} parent=5 // pred_region
        // Predicated region
        $region21: #{tpu_custom_call.1} parent=19 // pred_check
          %p122 = pneg %p45
        $region22: #{tpu_custom_call.1} parent=19 // pred_check_branch
          %124 = sbr.rel (%p122) target = $region24
        $region23: #{tpu_custom_call.1} parent=19 // pred_region
          %s125 = smul.u32 2, %s19
          %p126 = scmp.lt.s32.totalorder %s18, 1
          %s127 = scalar_select %p126, %s18, 1
          %p128 = scmp.lt.s32.totalorder %s125, 1
          %s129 = scalar_select %p128, %s125, 1
          %s130 = smul.addr %s127, 2
          %s131 = sadd.s32 %s129, %s130
          %s132 = smul.addr %s131, 4
          %s133 = scalar_lea.vmem %s0, %s132
          %s134 = smul.u32 2, %s19
        $region24: #{tpu_custom_call.1} parent=19 // pred_fallthru
          _
      $region20: #{tpu_custom_call.1} parent=5 // pred_fallthru
        _
      %p135 = scmp.le.s32.totalorder 1, %s11
      %p136 = scmp.lt.s32.totalorder %s11, 3
      %p137 = pnand %p135, %p136
      %p138 = pneg %p137
      // Predicated region
      $region25: #{tpu_custom_call.1} parent=5 // pred_check
        _
      $region26: #{tpu_custom_call.1} parent=5 // pred_check_branch
        %140 = sbr.rel (%p137) target = $region28
      $region27: #{tpu_custom_call.1} parent=5 // pred_region
        %s141 = ssub.s32 %s11, 1
        %s142 = smul.u32 2, %s21
        %p143 = scmp.lt.s32.totalorder %s20, 1
        %s144 = scalar_select %p143, %s20, 1
        %p145 = scmp.lt.s32.totalorder %s142, 1
        %s146 = scalar_select %p145, %s142, 1
        %s147 = smul.addr %s144, 2
        %s148 = sadd.s32 %s146, %s147
        %s149 = smul.addr %s148, 4
        %s150 = scalar_lea.vmem %s0, %s149
        %p151 = pneg %p51
        %p152 = pneg %p48
        %p153 = pneg %p72
        %p154 = pneg %p69
        %p155 = pneg %p100
        %p156 = pneg %p97
        %s157 = sand.u32 %s87, 1
        %s158 = scalar_lea.sflag [#allocation4], %s157
        %s159 = sand.u32 %s87, 1
        %s160 = smul.addr %s159, 2
        %s161 = scalar_lea.vmem [#allocation3], %s160
        %s162 = smul.u32 2, %s21
        %p163 = scmp.lt.s32.totalorder %s20, 1
        %s164 = scalar_select %p163, %s20, 1
        %p165 = scmp.lt.s32.totalorder %s162, 1
        %s166 = scalar_select %p165, %s162, 1
        %s167 = smul.addr %s164, 2
        %s168 = sadd.s32 %s166, %s167
        %s169 = smul.addr %s168, 4
        %s170 = scalar_lea.vmem %s0, %s169
        %s171 = smul.u32 2, %s21
        %s172 = smul.u32 2, %s21
        %v175 = vld [vmem:[%s170] sm:$0xff]
        %v177 = vcombine.high %v175, %v175
        %v179 = vpack.c.bf16 %v175, %v175
        %v180 = vpack.c.bf16 %v177, %v177
        %v183 = vunpack.c.l.b16 %v179
        %v184 = vunpack.c.l.b16 %v180
        %v185 = vpack.c.b16 %v184, %v183
        %187 = vst [vmem:[#allocation2] sm:$0x33] %v185
        %vm188 = vcmask 1042434
        %vm189 = vsmask.f32 2304
        %vm190 = vmand %vm188, %vm189
        %vm191 = vcmask 1046534
        %vm192 = vsmask.f32 6400
        %vm193 = vmand %vm191, %vm192
        %vm194 = vmor %vm193, %vm190
        %v195 = vld [vmem:[#allocation2] sm:$0x44]
        %v196 = vsel %vm194, 1065369472, %v195
        %197 = vst [vmem:[#allocation2] sm:$0x44] %v196
        %v198 = vld [vmem:[#allocation2] sm:$0x77]
        %v199 = vld [vmem:[%s1] sm:$0xf]
        %v200 = vld [vmem:[%s1 + $0x4] sm:$0xf]
        %v201 = vld [vmem:[%s1 + $0x8] sm:$0xf]
        %v202 = vld [vmem:[%s1 + $0xc] sm:$0xf]
        %v203 = vld [vmem:[%s1 + $0x10] sm:$0xf]
        %v204 = vld [vmem:[%s1 + $0x14] sm:$0xf]
        %v205 = vld [vmem:[%s1 + $0x18] sm:$0xf]
        %v206 = vld [vmem:[%s1 + $0x1c] sm:$0xf]
        %v207 = vld [vmem:[%s1 + $0x20] sm:$0xf]
        %v208 = vld [vmem:[%s1 + $0x24] sm:$0xf]
        %v209 = vld [vmem:[%s1 + $0x28] sm:$0xf]
        %v210 = vld [vmem:[%s1 + $0x2c] sm:$0xf]
        %v211 = vld [vmem:[%s1 + $0x30] sm:$0xf]
        %v212 = vld [vmem:[%s1 + $0x34] sm:$0xf]
        %v213 = vld [vmem:[%s1 + $0x38] sm:$0xf]
        %v214 = vld [vmem:[%s1 + $0x3c] sm:$0xf]
        %v231 = vunpack.c.l.b16 %v199
        %v232 = vunpack.c.l.b16 %v200
        %v233 = vunpack.c.l.b16 %v201
        %v234 = vunpack.c.l.b16 %v202
        %v235 = vunpack.c.l.b16 %v203
        %v236 = vunpack.c.l.b16 %v204
        %v237 = vunpack.c.l.b16 %v205
        %v238 = vunpack.c.l.b16 %v206
        %v239 = vunpack.c.l.b16 %v207
        %v240 = vunpack.c.l.b16 %v208
        %v241 = vunpack.c.l.b16 %v209
        %v242 = vunpack.c.l.b16 %v210
        %v243 = vunpack.c.l.b16 %v211
        %v244 = vunpack.c.l.b16 %v212
        %v245 = vunpack.c.l.b16 %v213
        %v246 = vunpack.c.l.b16 %v214
        %v247 = vpack.c.b16 %v232, %v231
        %v248 = vpack.c.b16 %v234, %v233
        %v249 = vpack.c.b16 %v236, %v235
        %v250 = vpack.c.b16 %v238, %v237
        %v251 = vpack.c.b16 %v240, %v239
        %v252 = vpack.c.b16 %v242, %v241
        %v253 = vpack.c.b16 %v244, %v243
        %v254 = vpack.c.b16 %v246, %v245
        %v256 = vunpack.c.l.b16 %v198
        %v257 = vunpack.c.h.b16 %v198
        %v258 = vpack.c.b16 %v256, %v256
        %v259 = vpack.c.b16 %v257, %v257
        %vm260 = vcmask 39936
        %v262 = vsel %vm260, %v247, 0
        %v265 = vsel %vm260, %v248, 0
        %v268 = vsel %vm260, %v249, 0
        %v271 = vsel %vm260, %v250, 0
        %v274 = vsel %vm260, %v251, 0
        %v277 = vsel %vm260, %v252, 0
        %v280 = vsel %vm260, %v253, 0
        %v283 = vsel %vm260, %v254, 0
        %vm285 = vcmask 1041408
        %vm286 = vcmask 1042432
        %v287 = vsel %vm285, 4294967295, 65535
        %v288 = vsel %vm286, %v287, 0
        %v290 = vand.u32 %v258, %v288
        %v293 = vand.u32 %v259, %v288
        %295 = vmatprep.subr.bf16.mxu0 %v293
        %296 = vmatpush1.bf16.msra.mxu0 %v290
        %297 = vmatprep.subr.bf16.mxu0 0
        %298 = vmatpush1.bf16.msra.mxu0 0
        %299 = vmatprep.subr.bf16.mxu0 0
        %300 = vmatpush1.bf16.msra.mxu0 0
        %301 = vmatprep.subr.bf16.mxu0 0
        %302 = vmatpush1.bf16.msra.mxu0 0
        %303 = vmatprep.subr.bf16.mxu0 0
        %304 = vmatpush1.bf16.msra.mxu0 0
        %305 = vmatprep.subr.bf16.mxu0 0
        %306 = vmatpush1.bf16.msra.mxu0 0
        %307 = vmatprep.subr.bf16.mxu0 0
        %308 = vmatpush1.bf16.msra.mxu0 0
        %309 = vmatprep.subr.bf16.mxu0 0
        %310 = vmatpush1.bf16.msra.mxu0 0
        %311 = vmatprep.subr.bf16.mxu0 0
        %312 = vmatpush1.bf16.msra.mxu0 0
        %313 = vmatprep.subr.bf16.mxu0 0
        %314 = vmatpush1.bf16.msra.mxu0 0
        %315 = vmatprep.subr.bf16.mxu0 0
        %316 = vmatpush1.bf16.msra.mxu0 0
        %317 = vmatprep.subr.bf16.mxu0 0
        %318 = vmatpush1.bf16.msra.mxu0 0
        %319 = vmatprep.subr.bf16.mxu0 0
        %320 = vmatpush1.bf16.msra.mxu0 0
        %321 = vmatprep.subr.bf16.mxu0 0
        %322 = vmatpush1.bf16.msra.mxu0 0
        %323 = vmatprep.subr.bf16.mxu0 0
        %324 = vmatpush1.bf16.msra.mxu0 0
        %325 = vmatprep.subr.bf16.mxu0 0
        %326 = vmatpush1.bf16.msra.mxu0 0
        %327 = vmatprep.mubr.bf16.mxu0 0
        %328 = vmatmul.mubr.bf16.gmra.mrb[0].mxu0 %v262
        %v329 = vpop.f32.mrb[0].mxu0
        %v330 = vadd.f32 0.0, %v329
        %v331 = vpop.f32.mrb[0].mxu0
        %v332 = vadd.f32 0.0, %v331
        %v333 = vpop.f32.mrb[0].mxu0
        %v334 = vadd.f32 0.0, %v333
        %v335 = vpop.f32.mrb[0].mxu0
        %v336 = vadd.f32 0.0, %v335
        %337 = vmatprep.mubr.bf16.mxu0 0
        %338 = vmatmul.mubr.bf16.gmra.mrb[0].mxu0 %v265
        %v339 = vpop.f32.mrb[0].mxu0
        %v340 = vadd.f32 0.0, %v339
        %v341 = vpop.f32.mrb[0].mxu0
        %v342 = vadd.f32 0.0, %v341
        %v343 = vpop.f32.mrb[0].mxu0
        %v344 = vadd.f32 0.0, %v343
        %v345 = vpop.f32.mrb[0].mxu0
        %v346 = vadd.f32 0.0, %v345
        %347 = vmatprep.mubr.bf16.mxu0 0
        %348 = vmatmul.mubr.bf16.gmra.mrb[0].mxu0 %v268
        %v349 = vpop.f32.mrb[0].mxu0
        %v350 = vadd.f32 0.0, %v349
        %v351 = vpop.f32.mrb[0].mxu0
        %v352 = vadd.f32 0.0, %v351
        %v353 = vpop.f32.mrb[0].mxu0
        %v354 = vadd.f32 0.0, %v353
        %v355 = vpop.f32.mrb[0].mxu0
        %v356 = vadd.f32 0.0, %v355
        %357 = vmatprep.mubr.bf16.mxu0 0
        %358 = vmatmul.mubr.bf16.gmra.mrb[0].mxu0 %v271
        %v359 = vpop.f32.mrb[0].mxu0
        %v360 = vadd.f32 0.0, %v359
        %v361 = vpop.f32.mrb[0].mxu0
        %v362 = vadd.f32 0.0, %v361
        %v363 = vpop.f32.mrb[0].mxu0
        %v364 = vadd.f32 0.0, %v363
        %v365 = vpop.f32.mrb[0].mxu0
        %v366 = vadd.f32 0.0, %v365
        %367 = vmatprep.mubr.bf16.mxu0 0
        %368 = vmatmul.mubr.bf16.gmra.mrb[0].mxu0 %v274
        %v369 = vpop.f32.mrb[0].mxu0
        %v370 = vadd.f32 0.0, %v369
        %v371 = vpop.f32.mrb[0].mxu0
        %v372 = vadd.f32 0.0, %v371
        %v373 = vpop.f32.mrb[0].mxu0
        %v374 = vadd.f32 0.0, %v373
        %v375 = vpop.f32.mrb[0].mxu0
        %v376 = vadd.f32 0.0, %v375
        %377 = vmatprep.mubr.bf16.mxu0 0
        %378 = vmatmul.mubr.bf16.gmra.mrb[0].mxu0 %v277
        %v379 = vpop.f32.mrb[0].mxu0
        %v380 = vadd.f32 0.0, %v379
        %v381 = vpop.f32.mrb[0].mxu0
        %v382 = vadd.f32 0.0, %v381
        %v383 = vpop.f32.mrb[0].mxu0
        %v384 = vadd.f32 0.0, %v383
        %v385 = vpop.f32.mrb[0].mxu0
        %v386 = vadd.f32 0.0, %v385
        %387 = vmatprep.mubr.bf16.mxu0 0
        %388 = vmatmul.mubr.bf16.gmra.mrb[0].mxu0 %v280
        %v389 = vpop.f32.mrb[0].mxu0
        %v390 = vadd.f32 0.0, %v389
        %v391 = vpop.f32.mrb[0].mxu0
        %v392 = vadd.f32 0.0, %v391
        %v393 = vpop.f32.mrb[0].mxu0
        %v394 = vadd.f32 0.0, %v393
        %v395 = vpop.f32.mrb[0].mxu0
        %v396 = vadd.f32 0.0, %v395
        %397 = vmatprep.mubr.bf16.mxu0 0
        %398 = vmatmul.mubr.bf16.gmra.mrb[0].mxu0 %v283
        %v399 = vpop.f32.mrb[0].mxu0
        %v400 = vadd.f32 0.0, %v399
        %v401 = vpop.f32.mrb[0].mxu0
        %v402 = vadd.f32 0.0, %v401
        %v403 = vpop.f32.mrb[0].mxu0
        %v404 = vadd.f32 0.0, %v403
        %v405 = vpop.f32.mrb[0].mxu0
        %v406 = vadd.f32 0.0, %v405
        %407 = vdwg.mxu0
        %v408 = vmin.f32 %v330, %v340
        %v409 = vmin.f32 %v334, %v344
        %v410 = vmin.f32 %v408, %v350
        %v411 = vmin.f32 %v409, %v354
        %v412 = vmin.f32 %v410, %v360
        %v413 = vmin.f32 %v411, %v364
        %v414 = vmin.f32 %v412, %v370
        %v415 = vmin.f32 %v413, %v374
        %v416 = vmin.f32 %v414, %v380
        %v417 = vmin.f32 %v415, %v384
        %v418 = vmin.f32 %v416, %v390
        %v419 = vmin.f32 %v417, %v394
        %v420 = vmin.f32 %v418, %v400
        %v421 = vmin.f32 %v419, %v404
        %v422 = vmin.f32 %v420, %v421
        %v423 = vrot.slane %v422, 4
        %v424 = vmin.f32 %v422, %v423
        %v425 = vrot.slane %v424, 2
        %v426 = vmin.f32 %v424, %v425
        %v427 = vrot.slane %v426, 1
        %v428 = vmin.f32 %v426, %v427
        %v429 = vmin.f32 %v332, %v342
        %v430 = vmin.f32 %v336, %v346
        %v431 = vmin.f32 %v429, %v352
        %v432 = vmin.f32 %v430, %v356
        %v433 = vmin.f32 %v431, %v362
        %v434 = vmin.f32 %v432, %v366
        %v435 = vmin.f32 %v433, %v372
        %v436 = vmin.f32 %v434, %v376
        %v437 = vmin.f32 %v435, %v382
        %v438 = vmin.f32 %v436, %v386
        %v439 = vmin.f32 %v437, %v392
        %v440 = vmin.f32 %v438, %v396
        %v441 = vmin.f32 %v439, %v402
        %v442 = vmin.f32 %v440, %v406
        %v443 = vmin.f32 %v441, %v442
        %v444 = vrot.slane %v443, 4
        %v445 = vmin.f32 %v443, %v444
        %v446 = vrot.slane %v445, 2
        %v447 = vmin.f32 %v445, %v446
        %v448 = vrot.slane %v447, 1
        %v449 = vmin.f32 %v447, %v448
        %v450 = vlaneseq
        %v451 = vshrl.u32 %v450, 7
        %v452 = vadd.s32 %v451, 8
        %v453 = vadd.s32 %v451, 16
        %v454 = vadd.s32 %v451, 24
        %v455 = vadd.s32 %v451, 32
        %v456 = vadd.s32 %v451, 40
        %v457 = vadd.s32 %v451, 48
        %v458 = vadd.s32 %v451, 56
        %v459 = vadd.s32 %v451, 64
        %v460 = vadd.s32 %v451, 72
        %v461 = vadd.s32 %v451, 80
        %v462 = vadd.s32 %v451, 88
        %v463 = vadd.s32 %v451, 96
        %v464 = vadd.s32 %v451, 104
        %v465 = vadd.s32 %v451, 112
        %v466 = vadd.s32 %v451, 120
        %vm467 = vcmp.eq.f32.partialorder %v330, %v428
        %vm468 = vcmp.eq.f32.partialorder %v332, %v449
        %vm469 = vcmp.eq.f32.partialorder %v334, %v428
        %vm470 = vcmp.eq.f32.partialorder %v336, %v449
        %vm471 = vcmp.eq.f32.partialorder %v340, %v428
        %vm472 = vcmp.eq.f32.partialorder %v342, %v449
        %vm473 = vcmp.eq.f32.partialorder %v344, %v428
        %vm474 = vcmp.eq.f32.partialorder %v346, %v449
        %vm475 = vcmp.eq.f32.partialorder %v350, %v428
        %vm476 = vcmp.eq.f32.partialorder %v352, %v449
        %vm477 = vcmp.eq.f32.partialorder %v354, %v428
        %vm478 = vcmp.eq.f32.partialorder %v356, %v449
        %vm479 = vcmp.eq.f32.partialorder %v360, %v428
        %vm480 = vcmp.eq.f32.partialorder %v362, %v449
        %vm481 = vcmp.eq.f32.partialorder %v364, %v428
        %vm482 = vcmp.eq.f32.partialorder %v366, %v449
        %vm483 = vcmp.eq.f32.partialorder %v370, %v428
        %vm484 = vcmp.eq.f32.partialorder %v372, %v449
        %vm485 = vcmp.eq.f32.partialorder %v374, %v428
        %vm486 = vcmp.eq.f32.partialorder %v376, %v449
        %vm487 = vcmp.eq.f32.partialorder %v380, %v428
        %vm488 = vcmp.eq.f32.partialorder %v382, %v449
        %vm489 = vcmp.eq.f32.partialorder %v384, %v428
        %vm490 = vcmp.eq.f32.partialorder %v386, %v449
        %vm491 = vcmp.eq.f32.partialorder %v390, %v428
        %vm492 = vcmp.eq.f32.partialorder %v392, %v449
        %vm493 = vcmp.eq.f32.partialorder %v394, %v428
        %vm494 = vcmp.eq.f32.partialorder %v396, %v449
        %vm495 = vcmp.eq.f32.partialorder %v400, %v428
        %vm496 = vcmp.eq.f32.partialorder %v402, %v449
        %vm497 = vcmp.eq.f32.partialorder %v404, %v428
        %vm498 = vcmp.eq.f32.partialorder %v406, %v449
        %v499 = vsel %vm467, %v451, 128
        %v500 = vsel %vm468, %v451, 128
        %v501 = vsel %vm469, %v452, 128
        %v502 = vsel %vm470, %v452, 128
        %v503 = vsel %vm471, %v453, 128
        %v504 = vsel %vm472, %v453, 128
        %v505 = vsel %vm473, %v454, 128
        %v506 = vsel %vm474, %v454, 128
        %v507 = vsel %vm475, %v455, 128
        %v508 = vsel %vm476, %v455, 128
        %v509 = vsel %vm477, %v456, 128
        %v510 = vsel %vm478, %v456, 128
        %v511 = vsel %vm479, %v457, 128
        %v512 = vsel %vm480, %v457, 128
        %v513 = vsel %vm481, %v458, 128
        %v514 = vsel %vm482, %v458, 128
        %v515 = vsel %vm483, %v459, 128
        %v516 = vsel %vm484, %v459, 128
        %v517 = vsel %vm485, %v460, 128
        %v518 = vsel %vm486, %v460, 128
        %v519 = vsel %vm487, %v461, 128
        %v520 = vsel %vm488, %v461, 128
        %v521 = vsel %vm489, %v462, 128
        %v522 = vsel %vm490, %v462, 128
        %v523 = vsel %vm491, %v463, 128
        %v524 = vsel %vm492, %v463, 128
        %v525 = vsel %vm493, %v464, 128
        %v526 = vsel %vm494, %v464, 128
        %v527 = vsel %vm495, %v465, 128
        %v528 = vsel %vm496, %v465, 128
        %v529 = vsel %vm497, %v466, 128
        %v530 = vsel %vm498, %v466, 128
        %vm531 = vcmp.lt.s32.totalorder %v499, %v503
        %v532 = vsel %vm531, %v499, %v503
        %vm533 = vcmp.lt.s32.totalorder %v501, %v505
        %v534 = vsel %vm533, %v501, %v505
        %vm535 = vcmp.lt.s32.totalorder %v532, %v507
        %v536 = vsel %vm535, %v532, %v507
        %vm537 = vcmp.lt.s32.totalorder %v534, %v509
        %v538 = vsel %vm537, %v534, %v509
        %vm539 = vcmp.lt.s32.totalorder %v536, %v511
        %v540 = vsel %vm539, %v536, %v511
        %vm541 = vcmp.lt.s32.totalorder %v538, %v513
        %v542 = vsel %vm541, %v538, %v513
        %vm543 = vcmp.lt.s32.totalorder %v540, %v515
        %v544 = vsel %vm543, %v540, %v515
        %vm545 = vcmp.lt.s32.totalorder %v542, %v517
        %v546 = vsel %vm545, %v542, %v517
        %vm547 = vcmp.lt.s32.totalorder %v544, %v519
        %v548 = vsel %vm547, %v544, %v519
        %vm549 = vcmp.lt.s32.totalorder %v546, %v521
        %v550 = vsel %vm549, %v546, %v521
        %vm551 = vcmp.lt.s32.totalorder %v548, %v523
        %v552 = vsel %vm551, %v548, %v523
        %vm553 = vcmp.lt.s32.totalorder %v550, %v525
        %v554 = vsel %vm553, %v550, %v525
        %vm555 = vcmp.lt.s32.totalorder %v552, %v527
        %v556 = vsel %vm555, %v552, %v527
        %vm557 = vcmp.lt.s32.totalorder %v554, %v529
        %v558 = vsel %vm557, %v554, %v529
        %vm559 = vcmp.lt.s32.totalorder %v556, %v558
        %v560 = vsel %vm559, %v556, %v558
        %v561 = vrot.slane %v560, 4
        %vm562 = vcmp.lt.s32.totalorder %v560, %v561
        %v563 = vsel %vm562, %v560, %v561
        %v564 = vrot.slane %v563, 2
        %vm565 = vcmp.lt.s32.totalorder %v563, %v564
        %v566 = vsel %vm565, %v563, %v564
        %v567 = vrot.slane %v566, 1
        %vm568 = vcmp.lt.s32.totalorder %v566, %v567
        %v569 = vsel %vm568, %v566, %v567
        %vm570 = vcmp.lt.s32.totalorder %v500, %v504
        %v571 = vsel %vm570, %v500, %v504
        %vm572 = vcmp.lt.s32.totalorder %v502, %v506
        %v573 = vsel %vm572, %v502, %v506
        %vm574 = vcmp.lt.s32.totalorder %v571, %v508
        %v575 = vsel %vm574, %v571, %v508
        %vm576 = vcmp.lt.s32.totalorder %v573, %v510
        %v577 = vsel %vm576, %v573, %v510
        %vm578 = vcmp.lt.s32.totalorder %v575, %v512
        %v579 = vsel %vm578, %v575, %v512
        %vm580 = vcmp.lt.s32.totalorder %v577, %v514
        %v581 = vsel %vm580, %v577, %v514
        %vm582 = vcmp.lt.s32.totalorder %v579, %v516
        %v583 = vsel %vm582, %v579, %v516
        %vm584 = vcmp.lt.s32.totalorder %v581, %v518
        %v585 = vsel %vm584, %v581, %v518
        %vm586 = vcmp.lt.s32.totalorder %v583, %v520
        %v587 = vsel %vm586, %v583, %v520
        %vm588 = vcmp.lt.s32.totalorder %v585, %v522
        %v589 = vsel %vm588, %v585, %v522
        %vm590 = vcmp.lt.s32.totalorder %v587, %v524
        %v591 = vsel %vm590, %v587, %v524
        %vm592 = vcmp.lt.s32.totalorder %v589, %v526
        %v593 = vsel %vm592, %v589, %v526
        %vm594 = vcmp.lt.s32.totalorder %v591, %v528
        %v595 = vsel %vm594, %v591, %v528
        %vm596 = vcmp.lt.s32.totalorder %v593, %v530
        %v597 = vsel %vm596, %v593, %v530
        %vm598 = vcmp.lt.s32.totalorder %v595, %v597
        %v599 = vsel %vm598, %v595, %v597
        %v600 = vrot.slane %v599, 4
        %vm601 = vcmp.lt.s32.totalorder %v599, %v600
        %v602 = vsel %vm601, %v599, %v600
        %v603 = vrot.slane %v602, 2
        %vm604 = vcmp.lt.s32.totalorder %v602, %v603
        %v605 = vsel %vm604, %v602, %v603
        %v606 = vrot.slane %v605, 1
        %vm607 = vcmp.lt.s32.totalorder %v605, %v606
        %v608 = vsel %vm607, %v605, %v606
        %vm609 = vcmp.lt.f32.partialorder %v428, inf
        %vm610 = vcmp.lt.f32.partialorder %v449, inf
        %v611 = vsel %vm609, %v569, 0
        %v612 = vsel %vm610, %v608, 0
        %v613 = vcombine.low %v611, %v612
        %v615 = vunpack.c.l.s4 1966171168
        %v616 = vunpack.c.0.s8 %v615
        %v617 = vlaneseq
        %v618 = vshrl.u32 %v617, 7
        %v619 = vsub.s32 %v616, %v618
        %v620 = vrot.slane %v613, %v619
        %v622 = vunpack.c.l.s4 1966171168
        %v623 = vunpack.c.0.s8 %v622
        %v624 = vlaneseq
        %v625 = vshrl.u32 %v624, 7
        %v626 = vsub.s32 %v623, %v625
        %v627 = vrot.slane %v620, %v626
        %v628 = vlaneseq
        %vm629 = vcmp.ge.s32.totalorder %v628, 0
        %vm630 = vcmp.lt.s32.totalorder %v628, 256
        %vm631 = vmand %vm629, %vm630
        %632 = vst.msk [vmem:[%s161] sm:$0x3] %vm631, %v627
        %s633 = sand.u32 %s87, 1
        %s634 = scalar_lea.sflag [#allocation4], %s633
        %s635 = sand.u32 %s87, 1
        %s636 = smul.addr %s635, 2
        %s637 = scalar_lea.vmem [#allocation3], %s636
        // Predicated region
        $region29: #{tpu_custom_call.1} parent=27 // pred_check
          %p638 = pneg %p97
        $region30: #{tpu_custom_call.1} parent=27 // pred_check_branch
          %640 = sbr.rel (%p638) target = $region32
        $region31: #{tpu_custom_call.1} parent=27 // pred_region
          %s641 = smul.u32 2, %s21
          %s643 = ssub.s32 32, 32
          %644 = vsyncadd %s634, %s643
          %s645 = smul.addr %s20, 2
          %s646 = sadd.s32 %s641, %s645
          %s647 = smul.addr %s646, 16
          %s648 = scalar_lea.hbm %s2, %s647
          %s650 = sshll.u32 %s637, 4
          %s651 = int_to_ptr.vmem [resolvable:$true] %s650
          %653 = dma.vmem_to_hbm [thread:$0]  %s651, 32, %s648, %s634
        $region32: #{tpu_custom_call.1} parent=27 // pred_fallthru
          _
      $region28: #{tpu_custom_call.1} parent=5 // pred_fallthru
        _
      %p654 = scmp.le.s32.totalorder 2, %s11
      // Predicated region
      $region33: #{tpu_custom_call.1} parent=5 // pred_check
        %p655 = pneg %p654
      $region34: #{tpu_custom_call.1} parent=5 // pred_check_branch
        %657 = sbr.rel (%p655) target = $region36
      $region35: #{tpu_custom_call.1} parent=5 // pred_region
        %s658 = ssub.s32 %s11, 2
        // Predicated region
        $region37: #{tpu_custom_call.1} parent=35 // pred_check
          %p659 = pneg %p103
        $region38: #{tpu_custom_call.1} parent=35 // pred_check_branch
          %661 = sbr.rel (%p659) target = $region40
        $region39: #{tpu_custom_call.1} parent=35 // pred_region
          %s662 = sand.u32 %s88, 1
          %s663 = scalar_lea.sflag [#allocation4], %s662
          %s664 = sand.u32 %s88, 1
          %s665 = smul.addr %s664, 2
          %s666 = scalar_lea.vmem [#allocation3], %s665
          %667 = dma.done %s663, 32
        $region40: #{tpu_custom_call.1} parent=35 // pred_fallthru
          _
      $region36: #{tpu_custom_call.1} parent=5 // pred_fallthru
        _
    $region6: #{tpu_custom_call.1} parent=1 // loop_footer
      %s15 = sadd.s32 1, %s11
    $region7: #{tpu_custom_call.1} parent=1 // loop_footer_branch
      %10 = sbr.rel target = $region3
    $region8: #{tpu_custom_call.1} parent=1 // loop_exit
      _
    %668 = vsyncpa [#allocation4], 1
    %s669 = scalar_lea.sflag [#allocation4], 1
    %670 = vsyncpa %s669, 1

</llo_original>
